<compile_context>
chip_gen: v7x
topology: tpu7x:2x2x1
jax: 0.10.0
libtpu: 0.0.40
codegen_flags: <defaults>
</compile_context>

<pallas_src>
import jax
import jax.numpy as jnp
from jax.experimental import pallas as pl
from jax.experimental.pallas import tpu as pltpu

N_GAUSS = 25
OUT_DIM = 4
KD = N_GAUSS * OUT_DIM          # 100
H3_PAD = 256                    # layer-3 output, padded 200 -> 256
HEAD_PAD = 384                  # fused head columns (3 x 128-lane blocks)
MU_OFF = 128                    # mu slice starts at lane 128
SD_OFF = 256                    # log-sd slice starts at lane 256
IN_PAD = 128                    # packed per-row input width
OUT_PAD = 128                   # lane-dense output width


def backward_kernel(xin_ref,
                    w1_ref, b1_ref, w2_ref, b2_ref, w3_ref, b3_ref,
                    wh_ref, bh_ref, tri_ref, sel_ref, gid_ref,
                    out_ref):
    K = N_GAUSS
    xin = xin_ref[...]                                   # (TB,128): eps|u|x0|0

    # --- Layer 1: Linear(3,128)+ReLU via three VPU broadcast FMAs (K=3 would
    #     waste an MXU pass).  x0 lives in lanes 5..7 of the packed input.
    w1 = w1_ref[...]                                     # (3,128) f32
    h = (xin[:, 5:6] * w1[0:1, :]
         + xin[:, 6:7] * w1[1:2, :]
         + xin[:, 7:8] * w1[2:3, :]
         + b1_ref[...])
    h = jnp.maximum(h, 0.0)                              # (TB,128)

    # --- Layers 2 & 3 on the MXU: bf16 weights/LHS, f32 accumulate, 256-lane
    #     dense output (layer 3 is zero padded 200 -> 256).
    h = jnp.maximum(
        jnp.dot(h.astype(jnp.bfloat16), w2_ref[...],
                preferred_element_type=jnp.float32) + b2_ref[...], 0.0)  # (TB,256)
    h = jnp.maximum(
        jnp.dot(h.astype(jnp.bfloat16), w3_ref[...],
                preferred_element_type=jnp.float32) + b3_ref[...], 0.0)  # (TB,256)

    # --- Fused pi/mu/log-sd heads; every slice starts on a 128-lane boundary.
    heads = jnp.dot(h.astype(jnp.bfloat16), wh_ref[...],
                    preferred_element_type=jnp.float32) + bh_ref[...]    # (TB,384)

    # --- softmax(dim=1) over mixture logits (max-stabilised, f32).
    logits = heads[:, 0:K]
    logits = logits - jnp.max(logits, axis=1, keepdims=True)
    e = jnp.exp(logits)
    pi = e * pl.reciprocal(jnp.sum(e, axis=1, keepdims=True), approx=False)

    # --- categorical draw (torch.multinomial, 1 draw/row) via inverse CDF;
    #     cumsum(pi) expressed as a matmul against upper-triangular ones.
    cdf = jnp.dot(pi, tri_ref[...], preferred_element_type=jnp.float32)  # (TB,K)
    u = xin[:, 4:5]                                                      # (TB,1)
    idx = jnp.sum((cdf < u).astype(jnp.int32), axis=1, keepdims=True)
    idx = jnp.minimum(idx, K - 1)                                        # (TB,1)

    # --- one-hot group mask over the [mu | log-sd] tail (lanes 128:384),
    #     then ONE fused selection matmul: mu_sel -> lanes 0:4,
    #     log-sd_sel -> lanes 128:132 of a (TB,256) result.
    mask = (gid_ref[...] == idx).astype(jnp.float32)                     # (TB,256)
    lhs = heads[:, MU_OFF:HEAD_PAD] * mask                               # (TB,256)
    selres = jnp.dot(lhs, sel_ref[...],
                     preferred_element_type=jnp.float32)                 # (TB,256)
    mu_sel = selres[:, 0:OUT_PAD]                                        # mu in lanes 0:4
    logsd_sel = selres[:, OUT_PAD:2 * OUT_PAD]                           # log-sd in lanes 0:4

    # --- reparametrized sample: out = mu + eps * exp(log-sd).  eps sits in
    #     lanes 0:4 of the packed input, so only lanes 0:4 of this 128-lane
    #     block are meaningful (lanes 4:8 hold harmless junk, sliced off by
    #     the wrapper; lanes 8:128 are exactly zero).
    out_ref[...] = mu_sel + xin * jnp.exp(logsd_sel)


def init_params(key):
    """PyTorch nn.Linear default init: U(-1/sqrt(fan_in), 1/sqrt(fan_in))."""
    def linear(k, fan_in, fan_out):
        k1, k2 = jax.random.split(k)
        bound = 1.0 / float(fan_in) ** 0.5
        w = jax.random.uniform(k1, (fan_in, fan_out), jnp.float32, -bound, bound)
        b = jax.random.uniform(k2, (1, fan_out), jnp.float32, -bound, bound)
        return w, b

    keys = jax.random.split(key, 6)
    w1, b1 = linear(keys[0], 3, 128)
    w2, b2 = linear(keys[1], 128, 256)
    w3, b3 = linear(keys[2], 256, 200)
    piw, pib = linear(keys[3], 200, N_GAUSS)
    muw, mub = linear(keys[4], 200, KD)
    sdw, sdb = linear(keys[5], 200, KD)
    return (w1, b1, w2, b2, w3, b3, piw, pib, muw, mub, sdw, sdb)


def _pick_tile(B):
    # Large tiles amortise the ~0.35us per-grid-step cost.  For large B keep
    # the grid >= 2 so the "parallel" axis can feed both v7x TensorCores.
    cap = B if B < 16 else B // 2
    for cand in (2048, 1024, 512, 256, 128, 64, 32, 16, 8):
        if cand <= cap and B % cand == 0:
            return cand
    return B


def backward_forward(x0, params, key):
    """Equivalent of Backward.forward(x0) with pretrain=None (first sample)."""
    # TODO(synk): the `pretrain is not None` branch (host-side .item() best-of-n
    # selection loop) has no Pallas equivalent and is not implemented.
    B = x0.shape[0]
    K, D = N_GAUSS, OUT_DIM

    ku, ke = jax.random.split(key)
    u = jax.random.uniform(ku, (B, 1), jnp.float32)      # inverse-CDF uniform
    eps = jax.random.normal(ke, (B, D), jnp.float32)     # Normal.rsample noise

    (w1, b1, w2, b2, w3, b3, piw, pib, muw, mub, sdw, sdb) = params

    # --- one packed, lane-dense per-row input: [eps(4) | u(1) | x0(3) | 0...]
    xin = jnp.concatenate(
        [eps, u, x0, jnp.zeros((B, IN_PAD - 8), jnp.float32)], axis=1)   # (B,128)

    # --- layer 3 zero-padded to 256 output columns.
    w3p = jnp.zeros((256, H3_PAD), jnp.float32).at[:, 0:200].set(w3)
    b3p = jnp.zeros((1, H3_PAD), jnp.float32).at[:, 0:200].set(b3)

    # --- fused heads on 128-lane boundaries: logits@0, mu@128, log-sd@256.
    wh = jnp.zeros((H3_PAD, HEAD_PAD), jnp.float32)
    wh = wh.at[0:200, 0:K].set(piw)
    wh = wh.at[0:200, MU_OFF:MU_OFF + KD].set(muw)
    wh = wh.at[0:200, SD_OFF:SD_OFF + KD].set(sdw)
    bh = jnp.zeros((1, HEAD_PAD), jnp.float32)
    bh = bh.at[:, 0:K].set(pib)
    bh = bh.at[:, MU_OFF:MU_OFF + KD].set(mub)
    bh = bh.at[:, SD_OFF:SD_OFF + KD].set(sdb)

    # --- hoisted constants.
    tri = (jnp.arange(K)[:, None] <= jnp.arange(K)[None, :]).astype(jnp.float32)  # (K,K)

    j = jnp.arange(2 * OUT_PAD)
    gid = jnp.where(j < KD, j // D,
                    jnp.where((j >= OUT_PAD) & (j < OUT_PAD + KD),
                              (j - OUT_PAD) // D, K))        # sentinel K never matches
    gid = gid.astype(jnp.int32)[None, :]                     # (1,256)

    sel = jnp.zeros((2 * OUT_PAD, 2 * OUT_PAD), jnp.float32)  # (256,256) block-diag gather
    mu_rows = jnp.arange(KD)
    sel = sel.at[mu_rows, mu_rows % D].set(1.0)
    sd_rows = jnp.arange(OUT_PAD, OUT_PAD + KD)
    sel = sel.at[sd_rows, OUT_PAD + (sd_rows - OUT_PAD) % D].set(1.0)

    # --- bf16 weights for the big MXU layers (half the resident weight bytes).
    w2b = w2.astype(jnp.bfloat16)
    w3b = w3p.astype(jnp.bfloat16)
    whb = wh.astype(jnp.bfloat16)

    tile_b = _pick_tile(B)
    grid = (B // tile_b,)

    row_spec = pl.BlockSpec((tile_b, IN_PAD), lambda i: (i, 0))
    out_spec = pl.BlockSpec((tile_b, OUT_PAD), lambda i: (i, 0))

    def resident(arr):
        return pl.BlockSpec(arr.shape, lambda i: (0, 0))     # constant index_map: DMA'd once

    inputs = (xin, w1, b1, w2b, b2, w3b, b3p, whb, bh, tri, sel, gid)
    in_specs = [row_spec] + [resident(a) for a in inputs[1:]]

    out = pl.pallas_call(
        backward_kernel,
        out_shape=jax.ShapeDtypeStruct((B, OUT_PAD), jnp.float32),
        grid=grid,
        in_specs=in_specs,
        out_specs=out_spec,
        compiler_params=pltpu.CompilerParams(
            dimension_semantics=("parallel",),
            vmem_limit_bytes=48 * 1024 * 1024),
    )(*inputs)
    return out[:, 0:D]


if __name__ == "__main__":
    key = jax.random.PRNGKey(0)
    kp, kx, ks = jax.random.split(key, 3)
    params = init_params(kp)

    B = 8
    x0 = jax.random.normal(kx, (B, 3), jnp.float32)          # module input: (batch, 3)

    out = backward_forward(x0, params, ks)
    jax.block_until_ready(out)
    assert out.shape == (B, OUT_DIM) and out.dtype == jnp.float32
    assert bool(jnp.all(jnp.isfinite(out)))
    print("KERNEL_OK")
</pallas_src>

<mosaic_0001>
module attributes {stable_mosaic.version = 11 : i64} {
  func.func @backward_kernel(%arg0: i32, %arg1: memref<8x128xf32, #tpu.memory_space<vmem>>, %arg2: memref<3x128xf32, #tpu.memory_space<vmem>>, %arg3: memref<1x128xf32, #tpu.memory_space<vmem>>, %arg4: memref<128x256xbf16, #tpu.memory_space<vmem>>, %arg5: memref<1x256xf32, #tpu.memory_space<vmem>>, %arg6: memref<256x256xbf16, #tpu.memory_space<vmem>>, %arg7: memref<1x256xf32, #tpu.memory_space<vmem>>, %arg8: memref<256x384xbf16, #tpu.memory_space<vmem>>, %arg9: memref<1x384xf32, #tpu.memory_space<vmem>>, %arg10: memref<25x25xf32, #tpu.memory_space<vmem>>, %arg11: memref<256x256xf32, #tpu.memory_space<vmem>>, %arg12: memref<1x256xi32, #tpu.memory_space<vmem>>, %arg13: memref<8x128xf32, #tpu.memory_space<vmem>>) attributes {dimension_semantics = [#tpu.dimension_semantics<parallel>], iteration_bounds = array<i64: 1>, scalar_prefetch = 0 : i64, scratch_operands = 0 : i64, tpu.core_type = #tpu.core_type<tc>, window_params = [{transform_indices = @transform_0, window_bounds = array<i64: 8, 128>}, {pipeline_mode = #tpu.pipeline_mode<synchronous>, transform_indices = @transform_1, window_bounds = array<i64: 3, 128>}, {pipeline_mode = #tpu.pipeline_mode<synchronous>, transform_indices = @transform_2, window_bounds = array<i64: 1, 128>}, {pipeline_mode = #tpu.pipeline_mode<synchronous>, transform_indices = @transform_3, window_bounds = array<i64: 128, 256>}, {pipeline_mode = #tpu.pipeline_mode<synchronous>, transform_indices = @transform_4, window_bounds = array<i64: 1, 256>}, {pipeline_mode = #tpu.pipeline_mode<synchronous>, transform_indices = @transform_5, window_bounds = array<i64: 256, 256>}, {pipeline_mode = #tpu.pipeline_mode<synchronous>, transform_indices = @transform_6, window_bounds = array<i64: 1, 256>}, {pipeline_mode = #tpu.pipeline_mode<synchronous>, transform_indices = @transform_7, window_bounds = array<i64: 256, 384>}, {pipeline_mode = #tpu.pipeline_mode<synchronous>, transform_indices = @transform_8, window_bounds = array<i64: 1, 384>}, {pipeline_mode = #tpu.pipeline_mode<synchronous>, transform_indices = @transform_9, window_bounds = array<i64: 25, 25>}, {pipeline_mode = #tpu.pipeline_mode<synchronous>, transform_indices = @transform_10, window_bounds = array<i64: 256, 256>}, {pipeline_mode = #tpu.pipeline_mode<synchronous>, transform_indices = @transform_11, window_bounds = array<i64: 1, 256>}, {transform_indices = @transform_12, window_bounds = array<i64: 8, 128>}]} {
    %c0 = arith.constant 0 : index
    %c0_0 = arith.constant 0 : index
    %0 = vector.load %arg1[%c0, %c0_0] : memref<8x128xf32, #tpu.memory_space<vmem>>, vector<8x128xf32>
    %c0_1 = arith.constant 0 : index
    %c0_2 = arith.constant 0 : index
    %1 = vector.load %arg2[%c0_1, %c0_2] : memref<3x128xf32, #tpu.memory_space<vmem>>, vector<3x128xf32>
    %2 = vector.extract_strided_slice %0 {offsets = [0, 5], sizes = [8, 1], strides = [1, 1]} : vector<8x128xf32> to vector<8x1xf32>
    %3 = vector.extract_strided_slice %1 {offsets = [0, 0], sizes = [1, 128], strides = [1, 1]} : vector<3x128xf32> to vector<1x128xf32>
    %4 = vector.broadcast %2 : vector<8x1xf32> to vector<8x128xf32>
    %5 = vector.broadcast %3 : vector<1x128xf32> to vector<8x128xf32>
    %6 = arith.mulf %4, %5 : vector<8x128xf32>
    %7 = vector.extract_strided_slice %0 {offsets = [0, 6], sizes = [8, 1], strides = [1, 1]} : vector<8x128xf32> to vector<8x1xf32>
    %8 = vector.extract_strided_slice %1 {offsets = [1, 0], sizes = [1, 128], strides = [1, 1]} : vector<3x128xf32> to vector<1x128xf32>
    %9 = vector.broadcast %7 : vector<8x1xf32> to vector<8x128xf32>
    %10 = vector.broadcast %8 : vector<1x128xf32> to vector<8x128xf32>
    %11 = arith.mulf %9, %10 : vector<8x128xf32>
    %12 = arith.addf %6, %11 : vector<8x128xf32>
    %13 = vector.extract_strided_slice %0 {offsets = [0, 7], sizes = [8, 1], strides = [1, 1]} : vector<8x128xf32> to vector<8x1xf32>
    %14 = vector.extract_strided_slice %1 {offsets = [2, 0], sizes = [1, 128], strides = [1, 1]} : vector<3x128xf32> to vector<1x128xf32>
    %15 = vector.broadcast %13 : vector<8x1xf32> to vector<8x128xf32>
    %16 = vector.broadcast %14 : vector<1x128xf32> to vector<8x128xf32>
    %17 = arith.mulf %15, %16 : vector<8x128xf32>
    %18 = arith.addf %12, %17 : vector<8x128xf32>
    %c0_3 = arith.constant 0 : index
    %c0_4 = arith.constant 0 : index
    %19 = vector.load %arg3[%c0_3, %c0_4] : memref<1x128xf32, #tpu.memory_space<vmem>>, vector<1x128xf32>
    %20 = vector.broadcast %19 : vector<1x128xf32> to vector<8x128xf32>
    %21 = arith.addf %18, %20 : vector<8x128xf32>
    %cst = arith.constant 0.000000e+00 : f32
    %22 = vector.broadcast %cst : f32 to vector<8x128xf32>
    %23 = arith.maximumf %21, %22 : vector<8x128xf32>
    %24 = arith.truncf %23 : vector<8x128xf32> to vector<8x128xbf16>
    %c0_5 = arith.constant 0 : index
    %c0_6 = arith.constant 0 : index
    %25 = vector.load %arg4[%c0_5, %c0_6] : memref<128x256xbf16, #tpu.memory_space<vmem>>, vector<128x256xbf16>
    %cst_7 = arith.constant dense<0.000000e+00> : vector<8x256xf32>
    %26 = tpu.matmul %24, %25, %cst_7 {dimension_numbers = #tpu.dot_dimension_numbers<[1], [0], [0], [1], [0, 0, 1, 1], [], []>} : vector<8x128xbf16>, vector<128x256xbf16>, vector<8x256xf32> -> vector<8x256xf32>
    %c0_8 = arith.constant 0 : index
    %c0_9 = arith.constant 0 : index
    %27 = vector.load %arg5[%c0_8, %c0_9] : memref<1x256xf32, #tpu.memory_space<vmem>>, vector<1x256xf32>
    %28 = vector.broadcast %27 : vector<1x256xf32> to vector<8x256xf32>
    %29 = arith.addf %26, %28 : vector<8x256xf32>
    %cst_10 = arith.constant 0.000000e+00 : f32
    %30 = vector.broadcast %cst_10 : f32 to vector<8x256xf32>
    %31 = arith.maximumf %29, %30 : vector<8x256xf32>
    %32 = arith.truncf %31 : vector<8x256xf32> to vector<8x256xbf16>
    %c0_11 = arith.constant 0 : index
    %c0_12 = arith.constant 0 : index
    %33 = vector.load %arg6[%c0_11, %c0_12] : memref<256x256xbf16, #tpu.memory_space<vmem>>, vector<256x256xbf16>
    %cst_13 = arith.constant dense<0.000000e+00> : vector<8x256xf32>
    %34 = tpu.matmul %32, %33, %cst_13 {dimension_numbers = #tpu.dot_dimension_numbers<[1], [0], [0], [1], [0, 0, 1, 1], [], []>} : vector<8x256xbf16>, vector<256x256xbf16>, vector<8x256xf32> -> vector<8x256xf32>
    %c0_14 = arith.constant 0 : index
    %c0_15 = arith.constant 0 : index
    %35 = vector.load %arg7[%c0_14, %c0_15] : memref<1x256xf32, #tpu.memory_space<vmem>>, vector<1x256xf32>
    %36 = vector.broadcast %35 : vector<1x256xf32> to vector<8x256xf32>
    %37 = arith.addf %34, %36 : vector<8x256xf32>
    %cst_16 = arith.constant 0.000000e+00 : f32
    %38 = vector.broadcast %cst_16 : f32 to vector<8x256xf32>
    %39 = arith.maximumf %37, %38 : vector<8x256xf32>
    %40 = arith.truncf %39 : vector<8x256xf32> to vector<8x256xbf16>
    %c0_17 = arith.constant 0 : index
    %c0_18 = arith.constant 0 : index
    %41 = vector.load %arg8[%c0_17, %c0_18] : memref<256x384xbf16, #tpu.memory_space<vmem>>, vector<256x384xbf16>
    %cst_19 = arith.constant dense<0.000000e+00> : vector<8x384xf32>
    %42 = tpu.matmul %40, %41, %cst_19 {dimension_numbers = #tpu.dot_dimension_numbers<[1], [0], [0], [1], [0, 0, 1, 1], [], []>} : vector<8x256xbf16>, vector<256x384xbf16>, vector<8x384xf32> -> vector<8x384xf32>
    %c0_20 = arith.constant 0 : index
    %c0_21 = arith.constant 0 : index
    %43 = vector.load %arg9[%c0_20, %c0_21] : memref<1x384xf32, #tpu.memory_space<vmem>>, vector<1x384xf32>
    %44 = vector.broadcast %43 : vector<1x384xf32> to vector<8x384xf32>
    %45 = arith.addf %42, %44 : vector<8x384xf32>
    %46 = vector.extract_strided_slice %45 {offsets = [0, 0], sizes = [8, 25], strides = [1, 1]} : vector<8x384xf32> to vector<8x25xf32>
    %cst_22 = arith.constant dense<0xFF800000> : vector<8xf32>
    %47 = vector.multi_reduction <maximumf>, %46, %cst_22 [1] : vector<8x25xf32> to vector<8xf32>
    %48 = vector.shape_cast %47 : vector<8xf32> to vector<8x1xf32>
    %49 = vector.broadcast %48 : vector<8x1xf32> to vector<8x25xf32>
    %50 = arith.subf %46, %49 : vector<8x25xf32>
    %51 = math.exp %50 : vector<8x25xf32>
    %cst_23 = arith.constant dense<0.000000e+00> : vector<8xf32>
    %52 = vector.multi_reduction <add>, %51, %cst_23 [1] : vector<8x25xf32> to vector<8xf32>
    %53 = vector.shape_cast %52 : vector<8xf32> to vector<8x1xf32>
    %54 = tpu.reciprocal %53 : vector<8x1xf32> -> vector<8x1xf32>
    %55 = vector.broadcast %54 : vector<8x1xf32> to vector<8x25xf32>
    %56 = arith.mulf %51, %55 : vector<8x25xf32>
    %c0_24 = arith.constant 0 : index
    %c0_25 = arith.constant 0 : index
    %57 = vector.load %arg10[%c0_24, %c0_25] : memref<25x25xf32, #tpu.memory_space<vmem>>, vector<25x25xf32>
    %cst_26 = arith.constant dense<0.000000e+00> : vector<8x25xf32>
    %58 = tpu.matmul %56, %57, %cst_26 {dimension_numbers = #tpu.dot_dimension_numbers<[1], [0], [0], [1], [0, 0, 1, 1], [], []>} : vector<8x25xf32>, vector<25x25xf32>, vector<8x25xf32> -> vector<8x25xf32>
    %59 = vector.extract_strided_slice %0 {offsets = [0, 4], sizes = [8, 1], strides = [1, 1]} : vector<8x128xf32> to vector<8x1xf32>
    %60 = vector.broadcast %59 : vector<8x1xf32> to vector<8x25xf32>
    %61 = arith.cmpf olt, %58, %60 : vector<8x25xf32>
    %62 = arith.extui %61 : vector<8x25xi1> to vector<8x25xi32>
    %cst_27 = arith.constant dense<0> : vector<8xi32>
    %63 = vector.multi_reduction <add>, %62, %cst_27 [1] : vector<8x25xi32> to vector<8xi32>
    %64 = vector.shape_cast %63 : vector<8xi32> to vector<8x1xi32>
    %c24_i32 = arith.constant 24 : i32
    %65 = vector.broadcast %c24_i32 : i32 to vector<8x1xi32>
    %66 = arith.minsi %64, %65 : vector<8x1xi32>
    %c0_28 = arith.constant 0 : index
    %c0_29 = arith.constant 0 : index
    %67 = vector.load %arg12[%c0_28, %c0_29] : memref<1x256xi32, #tpu.memory_space<vmem>>, vector<1x256xi32>
    %68 = vector.broadcast %67 : vector<1x256xi32> to vector<8x256xi32>
    %69 = vector.broadcast %66 : vector<8x1xi32> to vector<8x256xi32>
    %70 = arith.cmpi eq, %68, %69 : vector<8x256xi32>
    %71 = arith.extui %70 : vector<8x256xi1> to vector<8x256xi32>
    %72 = arith.sitofp %71 : vector<8x256xi32> to vector<8x256xf32>
    %73 = vector.extract_strided_slice %45 {offsets = [0, 128], sizes = [8, 256], strides = [1, 1]} : vector<8x384xf32> to vector<8x256xf32>
    %74 = arith.mulf %73, %72 : vector<8x256xf32>
    %c0_30 = arith.constant 0 : index
    %c0_31 = arith.constant 0 : index
    %75 = vector.load %arg11[%c0_30, %c0_31] : memref<256x256xf32, #tpu.memory_space<vmem>>, vector<256x256xf32>
    %cst_32 = arith.constant dense<0.000000e+00> : vector<8x256xf32>
    %76 = tpu.matmul %74, %75, %cst_32 {dimension_numbers = #tpu.dot_dimension_numbers<[1], [0], [0], [1], [0, 0, 1, 1], [], []>} : vector<8x256xf32>, vector<256x256xf32>, vector<8x256xf32> -> vector<8x256xf32>
    %77 = vector.extract_strided_slice %76 {offsets = [0, 0], sizes = [8, 128], strides = [1, 1]} : vector<8x256xf32> to vector<8x128xf32>
    %78 = vector.extract_strided_slice %76 {offsets = [0, 128], sizes = [8, 128], strides = [1, 1]} : vector<8x256xf32> to vector<8x128xf32>
    %79 = math.exp %78 : vector<8x128xf32>
    %80 = arith.mulf %0, %79 : vector<8x128xf32>
    %81 = arith.addf %77, %80 : vector<8x128xf32>
    %c0_33 = arith.constant 0 : index
    %c0_34 = arith.constant 0 : index
    %82 = vector.load %arg13[%c0_33, %c0_34] : memref<8x128xf32, #tpu.memory_space<vmem>>, vector<8x128xf32>
    tpu.vector_store %arg13[%c0_33, %c0_34], %81 {strides = array<i32>} : memref<8x128xf32, #tpu.memory_space<vmem>>, vector<8x128xf32>,
    return
  }
  func.func @transform_0(%arg0: i32) -> (i32, i32) {
    %c0_i32 = arith.constant 0 : i32
    %c0_i32_0 = arith.constant 0 : i32
    return %arg0, %c0_i32 : i32, i32
  }
  func.func @transform_1(%arg0: i32) -> (i32, i32) {
    %c0_i32 = arith.constant 0 : i32
    %c0_i32_0 = arith.constant 0 : i32
    %c0_i32_1 = arith.constant 0 : i32
    return %c0_i32, %c0_i32_0 : i32, i32
  }
  func.func @transform_2(%arg0: i32) -> (i32, i32) {
    %c0_i32 = arith.constant 0 : i32
    %c0_i32_0 = arith.constant 0 : i32
    %c0_i32_1 = arith.constant 0 : i32
    return %c0_i32, %c0_i32_0 : i32, i32
  }
  func.func @transform_3(%arg0: i32) -> (i32, i32) {
    %c0_i32 = arith.constant 0 : i32
    %c0_i32_0 = arith.constant 0 : i32
    %c0_i32_1 = arith.constant 0 : i32
    return %c0_i32, %c0_i32_0 : i32, i32
  }
  func.func @transform_4(%arg0: i32) -> (i32, i32) {
    %c0_i32 = arith.constant 0 : i32
    %c0_i32_0 = arith.constant 0 : i32
    %c0_i32_1 = arith.constant 0 : i32
    return %c0_i32, %c0_i32_0 : i32, i32
  }
  func.func @transform_5(%arg0: i32) -> (i32, i32) {
    %c0_i32 = arith.constant 0 : i32
    %c0_i32_0 = arith.constant 0 : i32
    %c0_i32_1 = arith.constant 0 : i32
    return %c0_i32, %c0_i32_0 : i32, i32
  }
  func.func @transform_6(%arg0: i32) -> (i32, i32) {
    %c0_i32 = arith.constant 0 : i32
    %c0_i32_0 = arith.constant 0 : i32
    %c0_i32_1 = arith.constant 0 : i32
    return %c0_i32, %c0_i32_0 : i32, i32
  }
  func.func @transform_7(%arg0: i32) -> (i32, i32) {
    %c0_i32 = arith.constant 0 : i32
    %c0_i32_0 = arith.constant 0 : i32
    %c0_i32_1 = arith.constant 0 : i32
    return %c0_i32, %c0_i32_0 : i32, i32
  }
  func.func @transform_8(%arg0: i32) -> (i32, i32) {
    %c0_i32 = arith.constant 0 : i32
    %c0_i32_0 = arith.constant 0 : i32
    %c0_i32_1 = arith.constant 0 : i32
    return %c0_i32, %c0_i32_0 : i32, i32
  }
  func.func @transform_9(%arg0: i32) -> (i32, i32) {
    %c0_i32 = arith.constant 0 : i32
    %c0_i32_0 = arith.constant 0 : i32
    %c0_i32_1 = arith.constant 0 : i32
    return %c0_i32, %c0_i32_0 : i32, i32
  }
  func.func @transform_10(%arg0: i32) -> (i32, i32) {
    %c0_i32 = arith.constant 0 : i32
    %c0_i32_0 = arith.constant 0 : i32
    %c0_i32_1 = arith.constant 0 : i32
    return %c0_i32, %c0_i32_0 : i32, i32
  }
  func.func @transform_11(%arg0: i32) -> (i32, i32) {
    %c0_i32 = arith.constant 0 : i32
    %c0_i32_0 = arith.constant 0 : i32
    %c0_i32_1 = arith.constant 0 : i32
    return %c0_i32, %c0_i32_0 : i32, i32
  }
  func.func @transform_12(%arg0: i32) -> (i32, i32) {
    %c0_i32 = arith.constant 0 : i32
    %c0_i32_0 = arith.constant 0 : i32
    return %arg0, %c0_i32 : i32, i32
  }
}

</mosaic_0001>

<llo_original>
// kernel: tpu_custom_call.1
$region0: #{tpu_custom_call.1}
  #allocation0 [shape = 'u32[]', space=smem, size = 0x4, offset = 0x4, fixed_abs, tag = 'smem constant byte address 0x4 - core index']
  #allocation1 [shape = 'u32[144,128]{1,0:T(1,128)}', space=vmem, size = 0x12000, scoped, tag = 'internal scratch']
  %s0 = inlined_call_operand.hbm [shape: f32[8,128], index: 0, kind: input, shape index: {}]
  %s1 = inlined_call_operand.hbm [shape: f32[3,128], index: 1, kind: input, shape index: {}]
  %s2 = inlined_call_operand.hbm [shape: f32[1,128], index: 2, kind: input, shape index: {}]
  %s3 = inlined_call_operand.hbm [shape: bf16[128,256], index: 3, kind: input, shape index: {}]
  %s4 = inlined_call_operand.vmem [shape: f32[1,256], index: 4, kind: input, shape index: {}]
  %s5 = inlined_call_operand.hbm [shape: bf16[256,256], index: 5, kind: input, shape index: {}]
  %s6 = inlined_call_operand.hbm [shape: f32[1,256], index: 6, kind: input, shape index: {}]
  %s7 = inlined_call_operand.hbm [shape: bf16[256,384], index: 7, kind: input, shape index: {}]
  %s8 = inlined_call_operand.hbm [shape: f32[1,384], index: 8, kind: input, shape index: {}]
  %s9 = inlined_call_operand.vmem [shape: f32[25,25], index: 9, kind: input, shape index: {}]
  %s10 = inlined_call_operand.hbm [shape: f32[256,256], index: 10, kind: input, shape index: {}]
  %s11 = inlined_call_operand.vmem [shape: s32[1,256], index: 11, kind: input, shape index: {}]
  %s12 = inlined_call_operand.hbm [shape: f32[8,128], index: 12, kind: output, shape index: {}]
  %s13 = sld [smem:[#allocation0]]
  $region94: #{tpu_custom_call.1} parent=0
    _
  %s15 = ssub.s32 1, %s13
  %s16 = scalar_select 0, %s15, %s13
  $region1: #{tpu_custom_call.1} parent=0
    #allocation2 [shape = 'u8[4096]{0}', space=vmem, size = 0x1000, scoped, tag = 'input window, operand 0, single buffered']
    #allocation3 [shape = 's32[1]{0}', space=sflag, size = 0x4, scoped, tag = 'scoped memory for tpu_custom_call.1']
    #allocation4 [shape = 's32[1]{0}', space=sflag, size = 0x4, scoped, tag = 'scoped memory for tpu_custom_call.1']
    #allocation5 [shape = 'u8[2048]{0}', space=vmem, size = 0x800, scoped, tag = 'input window, operand 1, single buffered']
    #allocation6 [shape = 's32[1]{0}', space=sflag, size = 0x4, scoped, tag = 'scoped memory for tpu_custom_call.1']
    #allocation7 [shape = 'u8[512]{0}', space=vmem, size = 0x400, scoped, tag = 'input window, operand 2, single buffered']
    #allocation8 [shape = 'u8[65536]{0}', space=vmem, size = 0x10000, scoped, tag = 'input window, operand 3, single buffered']
    #allocation9 [shape = 's32[1]{0}', space=sflag, size = 0x4, scoped, tag = 'scoped memory for tpu_custom_call.1']
    #allocation10 [shape = 'u8[131072]{0}', space=vmem, size = 0x20000, scoped, tag = 'input window, operand 5, single buffered']
    #allocation11 [shape = 'u8[1024]{0}', space=vmem, size = 0x400, scoped, tag = 'input window, operand 6, single buffered']
    #allocation12 [shape = 's32[1]{0}', space=sflag, size = 0x4, scoped, tag = 'scoped memory for tpu_custom_call.1']
    #allocation13 [shape = 'u8[196608]{0}', space=vmem, size = 0x30000, scoped, tag = 'input window, operand 7, single buffered']
    #allocation14 [shape = 'u8[1536]{0}', space=vmem, size = 0x800, scoped, tag = 'input window, operand 8, single buffered']
    #allocation15 [shape = 's32[1]{0}', space=sflag, size = 0x4, scoped, tag = 'scoped memory for tpu_custom_call.1']
    #allocation16 [shape = 'u8[262144]{0}', space=vmem, size = 0x40000, scoped, tag = 'input window, operand 10, single buffered']
    #allocation17 [shape = 'u8[4096]{0}', space=vmem, size = 0x1000, scoped, tag = 'output window, operand 0, single buffered']
    %17 = vsyncpa [#allocation3], 0
    %18 = vsyncpa [#allocation6], 0
    %19 = vsyncpa [#allocation9], 0
    %20 = vsyncpa [#allocation12], 0
    %21 = vsyncpa [#allocation15], 0
    %22 = vsyncpa [#allocation4], 0
    // Predicated region
    $region2: #{tpu_custom_call.1} parent=1 // pred_check
      _
    $region3: #{tpu_custom_call.1} parent=1 // pred_check_branch
      %24 = sbr.rel (0) target = $region5
    $region4: #{tpu_custom_call.1} parent=1 // pred_region
      %s26 = ssub.s32 128, 128
      %27 = vsyncadd [#allocation3], %s26
      %s29 = sshll.u32 [#allocation2], 4
      %s30 = int_to_ptr.vmem [resolvable:$true] %s29
      %32 = dma.hbm_to_vmem [thread:$0]  %s0, 128, %s30, [#allocation3]
    $region5: #{tpu_custom_call.1} parent=1 // pred_fallthru
      _
    // Predicated region
    $region6: #{tpu_custom_call.1} parent=1 // pred_check
      _
    $region7: #{tpu_custom_call.1} parent=1 // pred_check_branch
      %34 = sbr.rel (0) target = $region9
    $region8: #{tpu_custom_call.1} parent=1 // pred_region
      %s36 = ssub.s32 64, 64
      %37 = vsyncadd [#allocation6], %s36
      %s39 = sshll.u32 [#allocation5], 4
      %s40 = int_to_ptr.vmem [resolvable:$true] %s39
      %42 = dma.hbm_to_vmem [thread:$0]  %s1, 64, %s40, [#allocation6]
    $region9: #{tpu_custom_call.1} parent=1 // pred_fallthru
      _
    // Predicated region
    $region10: #{tpu_custom_call.1} parent=1 // pred_check
      _
    $region11: #{tpu_custom_call.1} parent=1 // pred_check_branch
      %44 = sbr.rel (0) target = $region13
    $region12: #{tpu_custom_call.1} parent=1 // pred_region
      %s46 = ssub.s32 16, 16
      %47 = vsyncadd [#allocation6], %s46
      %s49 = sshll.u32 [#allocation7], 4
      %s50 = int_to_ptr.vmem [resolvable:$true] %s49
      %52 = dma.hbm_to_vmem [thread:$0]  %s2, 16, %s50, [#allocation6]
    $region13: #{tpu_custom_call.1} parent=1 // pred_fallthru
      _
    // Predicated region
    $region14: #{tpu_custom_call.1} parent=1 // pred_check
      _
    $region15: #{tpu_custom_call.1} parent=1 // pred_check_branch
      %54 = sbr.rel (0) target = $region17
    $region16: #{tpu_custom_call.1} parent=1 // pred_region
      %s56 = ssub.s32 2048, 2048
      %57 = vsyncadd [#allocation9], %s56
      %s58 = sshll.u32 [#allocation8], 4
      %s59 = int_to_ptr.vmem [resolvable:$true] %s58
      %64 = dma.hbm_to_vmem [thread:$0]  %s3, 2048, %s59, [#allocation9], 128, 128, 8
    $region17: #{tpu_custom_call.1} parent=1 // pred_fallthru
      _
    // Predicated region
    $region18: #{tpu_custom_call.1} parent=1 // pred_check
      _
    $region19: #{tpu_custom_call.1} parent=1 // pred_check_branch
      %66 = sbr.rel (0) target = $region21
    $region20: #{tpu_custom_call.1} parent=1 // pred_region
      _
    $region21: #{tpu_custom_call.1} parent=1 // pred_fallthru
      _
    // Predicated region
    $region22: #{tpu_custom_call.1} parent=1 // pred_check
      _
    $region23: #{tpu_custom_call.1} parent=1 // pred_check_branch
      %68 = sbr.rel (0) target = $region25
    $region24: #{tpu_custom_call.1} parent=1 // pred_region
      %s70 = ssub.s32 4096, 4096
      %71 = vsyncadd [#allocation9], %s70
      %s72 = sshll.u32 [#allocation10], 4
      %s73 = int_to_ptr.vmem [resolvable:$true] %s72
      %78 = dma.hbm_to_vmem [thread:$0]  %s5, 4096, %s73, [#allocation9], 128, 128, 8
    $region25: #{tpu_custom_call.1} parent=1 // pred_fallthru
      _
    // Predicated region
    $region26: #{tpu_custom_call.1} parent=1 // pred_check
      _
    $region27: #{tpu_custom_call.1} parent=1 // pred_check_branch
      %80 = sbr.rel (0) target = $region29
    $region28: #{tpu_custom_call.1} parent=1 // pred_region
      %s82 = ssub.s32 32, 32
      %83 = vsyncadd [#allocation12], %s82
      %s85 = sshll.u32 [#allocation11], 4
      %s86 = int_to_ptr.vmem [resolvable:$true] %s85
      %88 = dma.hbm_to_vmem [thread:$0]  %s6, 32, %s86, [#allocation12]
    $region29: #{tpu_custom_call.1} parent=1 // pred_fallthru
      _
    // Predicated region
    $region30: #{tpu_custom_call.1} parent=1 // pred_check
      _
    $region31: #{tpu_custom_call.1} parent=1 // pred_check_branch
      %90 = sbr.rel (0) target = $region33
    $region32: #{tpu_custom_call.1} parent=1 // pred_region
      %s92 = ssub.s32 6144, 6144
      %93 = vsyncadd [#allocation12], %s92
      %s94 = sshll.u32 [#allocation13], 4
      %s95 = int_to_ptr.vmem [resolvable:$true] %s94
      %100 = dma.hbm_to_vmem [thread:$0]  %s7, 6144, %s95, [#allocation12], 192, 192, 12
    $region33: #{tpu_custom_call.1} parent=1 // pred_fallthru
      _
    // Predicated region
    $region34: #{tpu_custom_call.1} parent=1 // pred_check
      _
    $region35: #{tpu_custom_call.1} parent=1 // pred_check_branch
      %102 = sbr.rel (0) target = $region37
    $region36: #{tpu_custom_call.1} parent=1 // pred_region
      %s104 = ssub.s32 48, 48
      %105 = vsyncadd [#allocation15], %s104
      %s107 = sshll.u32 [#allocation14], 4
      %s108 = int_to_ptr.vmem [resolvable:$true] %s107
      %110 = dma.hbm_to_vmem [thread:$0]  %s8, 48, %s108, [#allocation15]
    $region37: #{tpu_custom_call.1} parent=1 // pred_fallthru
      _
    // Predicated region
    $region38: #{tpu_custom_call.1} parent=1 // pred_check
      _
    $region39: #{tpu_custom_call.1} parent=1 // pred_check_branch
      %112 = sbr.rel (0) target = $region41
    $region40: #{tpu_custom_call.1} parent=1 // pred_region
      _
    $region41: #{tpu_custom_call.1} parent=1 // pred_fallthru
      _
    // Predicated region
    $region42: #{tpu_custom_call.1} parent=1 // pred_check
      _
    $region43: #{tpu_custom_call.1} parent=1 // pred_check_branch
      %114 = sbr.rel (0) target = $region45
    $region44: #{tpu_custom_call.1} parent=1 // pred_region
      %s116 = ssub.s32 8192, 8192
      %117 = vsyncadd [#allocation15], %s116
      %s118 = sshll.u32 [#allocation16], 4
      %s119 = int_to_ptr.vmem [resolvable:$true] %s118
      %124 = dma.hbm_to_vmem [thread:$0]  %s10, 8192, %s119, [#allocation15], 256, 256, 16
    $region45: #{tpu_custom_call.1} parent=1 // pred_fallthru
      _
    // Predicated region
    $region46: #{tpu_custom_call.1} parent=1 // pred_check
      _
    $region47: #{tpu_custom_call.1} parent=1 // pred_check_branch
      %126 = sbr.rel (0) target = $region49
    $region48: #{tpu_custom_call.1} parent=1 // pred_region
      _
    $region49: #{tpu_custom_call.1} parent=1 // pred_fallthru
      _
    // Predicated region
    $region50: #{tpu_custom_call.1} parent=1 // pred_check
      _
    $region51: #{tpu_custom_call.1} parent=1 // pred_check_branch
      %128 = sbr.rel (0) target = $region53
    $region52: #{tpu_custom_call.1} parent=1 // pred_region
      %129 = dma.done [#allocation3], 128
    $region53: #{tpu_custom_call.1} parent=1 // pred_fallthru
      _
    // Predicated region
    $region54: #{tpu_custom_call.1} parent=1 // pred_check
      _
    $region55: #{tpu_custom_call.1} parent=1 // pred_check_branch
      %131 = sbr.rel (0) target = $region57
    $region56: #{tpu_custom_call.1} parent=1 // pred_region
      %132 = dma.done [#allocation6], 64
    $region57: #{tpu_custom_call.1} parent=1 // pred_fallthru
      _
    // Predicated region
    $region58: #{tpu_custom_call.1} parent=1 // pred_check
      _
    $region59: #{tpu_custom_call.1} parent=1 // pred_check_branch
      %134 = sbr.rel (0) target = $region61
    $region60: #{tpu_custom_call.1} parent=1 // pred_region
      %135 = dma.done [#allocation6], 16
    $region61: #{tpu_custom_call.1} parent=1 // pred_fallthru
      _
    // Predicated region
    $region62: #{tpu_custom_call.1} parent=1 // pred_check
      _
    $region63: #{tpu_custom_call.1} parent=1 // pred_check_branch
      %137 = sbr.rel (0) target = $region65
    $region64: #{tpu_custom_call.1} parent=1 // pred_region
      %138 = dma.done [#allocation9], 2048
    $region65: #{tpu_custom_call.1} parent=1 // pred_fallthru
      _
    // Predicated region
    $region66: #{tpu_custom_call.1} parent=1 // pred_check
      _
    $region67: #{tpu_custom_call.1} parent=1 // pred_check_branch
      %140 = sbr.rel (0) target = $region69
    $region68: #{tpu_custom_call.1} parent=1 // pred_region
      %141 = dma.done [#allocation9], 4096
    $region69: #{tpu_custom_call.1} parent=1 // pred_fallthru
      _
    // Predicated region
    $region70: #{tpu_custom_call.1} parent=1 // pred_check
      _
    $region71: #{tpu_custom_call.1} parent=1 // pred_check_branch
      %143 = sbr.rel (0) target = $region73
    $region72: #{tpu_custom_call.1} parent=1 // pred_region
      %144 = dma.done [#allocation12], 32
    $region73: #{tpu_custom_call.1} parent=1 // pred_fallthru
      _
    // Predicated region
    $region74: #{tpu_custom_call.1} parent=1 // pred_check
      _
    $region75: #{tpu_custom_call.1} parent=1 // pred_check_branch
      %146 = sbr.rel (0) target = $region77
    $region76: #{tpu_custom_call.1} parent=1 // pred_region
      %147 = dma.done [#allocation12], 6144
    $region77: #{tpu_custom_call.1} parent=1 // pred_fallthru
      _
    // Predicated region
    $region78: #{tpu_custom_call.1} parent=1 // pred_check
      _
    $region79: #{tpu_custom_call.1} parent=1 // pred_check_branch
      %149 = sbr.rel (0) target = $region81
    $region80: #{tpu_custom_call.1} parent=1 // pred_region
      %150 = dma.done [#allocation15], 48
    $region81: #{tpu_custom_call.1} parent=1 // pred_fallthru
      _
    // Predicated region
    $region82: #{tpu_custom_call.1} parent=1 // pred_check
      _
    $region83: #{tpu_custom_call.1} parent=1 // pred_check_branch
      %152 = sbr.rel (0) target = $region85
    $region84: #{tpu_custom_call.1} parent=1 // pred_region
      %153 = dma.done [#allocation15], 8192
    $region85: #{tpu_custom_call.1} parent=1 // pred_fallthru
      _
    %v155 = vld [vmem:[#allocation2] sm:$0xff]
    %v156 = vld [vmem:[#allocation5] sm:$0x7]
    %158 = vset.pattern.permute.xlu0 5
    %159 = vperm.xlu0 %158, %v155
    %v160 = vpop.permute.xlu0 %159
    %v162 = vlaneseq
    %v163 = vshrl.u32 %v162, 7
    %v164 = vsub.s32 0, %v163
    %v165 = vrot.slane %v156, %v164
    %v166 = vmul.f32 %v160, %v165
    %167 = vset.pattern.permute.xlu0 6
    %168 = vperm.xlu0 %167, %v155
    %v169 = vpop.permute.xlu0 %168
    %v171 = vlaneseq
    %v172 = vshrl.u32 %v171, 7
    %v173 = vsub.s32 1, %v172
    %v174 = vrot.slane %v156, %v173
    %v175 = vmul.f32 %v169, %v174
    %v176 = vadd.f32 %v166, %v175
    %177 = vset.pattern.permute.xlu0 7
    %178 = vperm.xlu0 %177, %v155
    %v179 = vpop.permute.xlu0 %178
    %v181 = vlaneseq
    %v182 = vshrl.u32 %v181, 7
    %v183 = vsub.s32 2, %v182
    %v184 = vrot.slane %v156, %v183
    %v185 = vmul.f32 %v179, %v184
    %v186 = vadd.f32 %v176, %v185
    %v187 = vld [vmem:[#allocation7] sm:$0x1]
    %v189 = vlaneseq
    %v190 = vshrl.u32 %v189, 7
    %v191 = vsub.s32 0, %v190
    %v192 = vrot.slane %v187, %v191
    %v194 = vadd.f32 %v186, %v192
    %v195 = vmax.f32 %v194, 0.0
    %v196 = vpack.c.bf16 %v195, %v195
    %v197 = vld [vmem:[#allocation8] sm:$0xff]
    %v198 = vld [vmem:[#allocation8 + $0x8] sm:$0xff]
    %v199 = vld [vmem:[#allocation8 + $0x10] sm:$0xff]
    %v200 = vld [vmem:[#allocation8 + $0x18] sm:$0xff]
    %v201 = vld [vmem:[#allocation8 + $0x20] sm:$0xff]
    %v202 = vld [vmem:[#allocation8 + $0x28] sm:$0xff]
    %v203 = vld [vmem:[#allocation8 + $0x30] sm:$0xff]
    %v204 = vld [vmem:[#allocation8 + $0x38] sm:$0xff]
    %v205 = vld [vmem:[#allocation8 + $0x40] sm:$0xff]
    %v206 = vld [vmem:[#allocation8 + $0x48] sm:$0xff]
    %v207 = vld [vmem:[#allocation8 + $0x50] sm:$0xff]
    %v208 = vld [vmem:[#allocation8 + $0x58] sm:$0xff]
    %v209 = vld [vmem:[#allocation8 + $0x60] sm:$0xff]
    %v210 = vld [vmem:[#allocation8 + $0x68] sm:$0xff]
    %v211 = vld [vmem:[#allocation8 + $0x70] sm:$0xff]
    %v212 = vld [vmem:[#allocation8 + $0x78] sm:$0xff]
    %v213 = vld [vmem:[%s4] sm:$0x3]
    %v215 = vlaneseq
    %v216 = vshrl.u32 %v215, 7
    %v217 = vsub.s32 0, %v216
    %v218 = vrot.slane %v213, %v217
    %v219 = vlaneseq
    %v220 = vshrl.u32 %v219, 7
    %v221 = vsub.s32 1, %v220
    %v222 = vrot.slane %v213, %v221
    %v241 = vunpack.c.l.b16 %v197
    %v242 = vunpack.c.h.b16 %v197
    %v243 = vunpack.c.l.b16 %v198
    %v244 = vunpack.c.h.b16 %v198
    %v245 = vunpack.c.l.b16 %v199
    %v246 = vunpack.c.h.b16 %v199
    %v247 = vunpack.c.l.b16 %v200
    %v248 = vunpack.c.h.b16 %v200
    %v249 = vunpack.c.l.b16 %v201
    %v250 = vunpack.c.h.b16 %v201
    %v251 = vunpack.c.l.b16 %v202
    %v252 = vunpack.c.h.b16 %v202
    %v253 = vunpack.c.l.b16 %v203
    %v254 = vunpack.c.h.b16 %v203
    %v255 = vunpack.c.l.b16 %v204
    %v256 = vunpack.c.h.b16 %v204
    %v257 = vunpack.c.l.b16 %v205
    %v258 = vunpack.c.h.b16 %v205
    %v259 = vunpack.c.l.b16 %v206
    %v260 = vunpack.c.h.b16 %v206
    %v261 = vunpack.c.l.b16 %v207
    %v262 = vunpack.c.h.b16 %v207
    %v263 = vunpack.c.l.b16 %v208
    %v264 = vunpack.c.h.b16 %v208
    %v265 = vunpack.c.l.b16 %v209
    %v266 = vunpack.c.h.b16 %v209
    %v267 = vunpack.c.l.b16 %v210
    %v268 = vunpack.c.h.b16 %v210
    %v269 = vunpack.c.l.b16 %v211
    %v270 = vunpack.c.h.b16 %v211
    %v271 = vunpack.c.l.b16 %v212
    %v272 = vunpack.c.h.b16 %v212
    %v273 = vpack.c.b16 %v243, %v241
    %v274 = vpack.c.b16 %v244, %v242
    %v275 = vpack.c.b16 %v247, %v245
    %v276 = vpack.c.b16 %v248, %v246
    %v277 = vpack.c.b16 %v251, %v249
    %v278 = vpack.c.b16 %v252, %v250
    %v279 = vpack.c.b16 %v255, %v253
    %v280 = vpack.c.b16 %v256, %v254
    %v281 = vpack.c.b16 %v259, %v257
    %v282 = vpack.c.b16 %v260, %v258
    %v283 = vpack.c.b16 %v263, %v261
    %v284 = vpack.c.b16 %v264, %v262
    %v285 = vpack.c.b16 %v267, %v265
    %v286 = vpack.c.b16 %v268, %v266
    %v287 = vpack.c.b16 %v271, %v269
    %v288 = vpack.c.b16 %v272, %v270
    %305 = vmatprep.subr.bf16.mxu0 %v274
    %306 = vmatpush1.bf16.msra.mxu0 %v273
    %307 = vmatprep.subr.bf16.mxu0 %v276
    %308 = vmatpush1.bf16.msra.mxu0 %v275
    %309 = vmatprep.subr.bf16.mxu0 %v278
    %310 = vmatpush1.bf16.msra.mxu0 %v277
    %311 = vmatprep.subr.bf16.mxu0 %v280
    %312 = vmatpush1.bf16.msra.mxu0 %v279
    %313 = vmatprep.subr.bf16.mxu0 %v282
    %314 = vmatpush1.bf16.msra.mxu0 %v281
    %315 = vmatprep.subr.bf16.mxu0 %v284
    %316 = vmatpush1.bf16.msra.mxu0 %v283
    %317 = vmatprep.subr.bf16.mxu0 %v286
    %318 = vmatpush1.bf16.msra.mxu0 %v285
    %319 = vmatprep.subr.bf16.mxu0 %v288
    %320 = vmatpush1.bf16.msra.mxu0 %v287
    %321 = vmatprep.subr.bf16.mxu0 0
    %322 = vmatpush1.bf16.msra.mxu0 0
    %323 = vmatprep.subr.bf16.mxu0 0
    %324 = vmatpush1.bf16.msra.mxu0 0
    %325 = vmatprep.subr.bf16.mxu0 0
    %326 = vmatpush1.bf16.msra.mxu0 0
    %327 = vmatprep.subr.bf16.mxu0 0
    %328 = vmatpush1.bf16.msra.mxu0 0
    %329 = vmatprep.subr.bf16.mxu0 0
    %330 = vmatpush1.bf16.msra.mxu0 0
    %331 = vmatprep.subr.bf16.mxu0 0
    %332 = vmatpush1.bf16.msra.mxu0 0
    %333 = vmatprep.subr.bf16.mxu0 0
    %334 = vmatpush1.bf16.msra.mxu0 0
    %335 = vmatprep.subr.bf16.mxu0 0
    %336 = vmatpush1.bf16.msra.mxu0 0
    %337 = vmatprep.mubr.bf16.mxu0 0
    %338 = vmatmul.mubr.bf16.gmra.mrb[0].mxu0 %v196
    %v339 = vpop.f32.mrb[0].mxu0
    %v340 = vadd.f32 %v218, %v339
    %v341 = vpop.f32.mrb[0].mxu0
    %v342 = vadd.f32 %v222, %v341
    %v343 = vpop.f32.mrb[0].mxu0
    %v344 = vpop.f32.mrb[0].mxu0
    %345 = vdwg.mxu0
    %v346 = vmax.f32 %v340, 0.0
    %v347 = vmax.f32 %v342, 0.0
    %v348 = vpack.c.bf16 %v346, %v346
    %v349 = vpack.c.bf16 %v347, %v347
    %v350 = vld [vmem:[#allocation10] sm:$0xff]
    %v351 = vld [vmem:[#allocation10 + $0x8] sm:$0xff]
    %v352 = vld [vmem:[#allocation10 + $0x10] sm:$0xff]
    %v353 = vld [vmem:[#allocation10 + $0x18] sm:$0xff]
    %v354 = vld [vmem:[#allocation10 + $0x20] sm:$0xff]
    %v355 = vld [vmem:[#allocation10 + $0x28] sm:$0xff]
    %v356 = vld [vmem:[#allocation10 + $0x30] sm:$0xff]
    %v357 = vld [vmem:[#allocation10 + $0x38] sm:$0xff]
    %v358 = vld [vmem:[#allocation10 + $0x40] sm:$0xff]
    %v359 = vld [vmem:[#allocation10 + $0x48] sm:$0xff]
    %v360 = vld [vmem:[#allocation10 + $0x50] sm:$0xff]
    %v361 = vld [vmem:[#allocation10 + $0x58] sm:$0xff]
    %v362 = vld [vmem:[#allocation10 + $0x60] sm:$0xff]
    %v363 = vld [vmem:[#allocation10 + $0x68] sm:$0xff]
    %v364 = vld [vmem:[#allocation10 + $0x70] sm:$0xff]
    %v365 = vld [vmem:[#allocation10 + $0x78] sm:$0xff]
    %v366 = vld [vmem:[#allocation10 + $0x80] sm:$0xff]
    %v367 = vld [vmem:[#allocation10 + $0x88] sm:$0xff]
    %v368 = vld [vmem:[#allocation10 + $0x90] sm:$0xff]
    %v369 = vld [vmem:[#allocation10 + $0x98] sm:$0xff]
    %v370 = vld [vmem:[#allocation10 + $0xa0] sm:$0xff]
    %v371 = vld [vmem:[#allocation10 + $0xa8] sm:$0xff]
    %v372 = vld [vmem:[#allocation10 + $0xb0] sm:$0xff]
    %v373 = vld [vmem:[#allocation10 + $0xb8] sm:$0xff]
    %v374 = vld [vmem:[#allocation10 + $0xc0] sm:$0xff]
    %v375 = vld [vmem:[#allocation10 + $0xc8] sm:$0xff]
    %v376 = vld [vmem:[#allocation10 + $0xd0] sm:$0xff]
    %v377 = vld [vmem:[#allocation10 + $0xd8] sm:$0xff]
    %v378 = vld [vmem:[#allocation10 + $0xe0] sm:$0xff]
    %v379 = vld [vmem:[#allocation10 + $0xe8] sm:$0xff]
    %v380 = vld [vmem:[#allocation10 + $0xf0] sm:$0xff]
    %v381 = vld [vmem:[#allocation10 + $0xf8] sm:$0xff]
    %v382 = vld [vmem:[#allocation11] sm:$0x3]
    %v384 = vlaneseq
    %v385 = vshrl.u32 %v384, 7
    %v386 = vsub.s32 0, %v385
    %v387 = vrot.slane %v382, %v386
    %v388 = vlaneseq
    %v389 = vshrl.u32 %v388, 7
    %v390 = vsub.s32 1, %v389
    %v391 = vrot.slane %v382, %v390
    %v426 = vunpack.c.l.b16 %v350
    %v427 = vunpack.c.h.b16 %v350
    %v428 = vunpack.c.l.b16 %v351
    %v429 = vunpack.c.h.b16 %v351
    %v430 = vunpack.c.l.b16 %v352
    %v431 = vunpack.c.h.b16 %v352
    %v432 = vunpack.c.l.b16 %v353
    %v433 = vunpack.c.h.b16 %v353
    %v434 = vunpack.c.l.b16 %v354
    %v435 = vunpack.c.h.b16 %v354
    %v436 = vunpack.c.l.b16 %v355
    %v437 = vunpack.c.h.b16 %v355
    %v438 = vunpack.c.l.b16 %v356
    %v439 = vunpack.c.h.b16 %v356
    %v440 = vunpack.c.l.b16 %v357
    %v441 = vunpack.c.h.b16 %v357
    %v442 = vunpack.c.l.b16 %v358
    %v443 = vunpack.c.h.b16 %v358
    %v444 = vunpack.c.l.b16 %v359
    %v445 = vunpack.c.h.b16 %v359
    %v446 = vunpack.c.l.b16 %v360
    %v447 = vunpack.c.h.b16 %v360
    %v448 = vunpack.c.l.b16 %v361
    %v449 = vunpack.c.h.b16 %v361
    %v450 = vunpack.c.l.b16 %v362
    %v451 = vunpack.c.h.b16 %v362
    %v452 = vunpack.c.l.b16 %v363
    %v453 = vunpack.c.h.b16 %v363
    %v454 = vunpack.c.l.b16 %v364
    %v455 = vunpack.c.h.b16 %v364
    %v456 = vunpack.c.l.b16 %v365
    %v457 = vunpack.c.h.b16 %v365
    %v458 = vunpack.c.l.b16 %v366
    %v459 = vunpack.c.h.b16 %v366
    %v460 = vunpack.c.l.b16 %v367
    %v461 = vunpack.c.h.b16 %v367
    %v462 = vunpack.c.l.b16 %v368
    %v463 = vunpack.c.h.b16 %v368
    %v464 = vunpack.c.l.b16 %v369
    %v465 = vunpack.c.h.b16 %v369
    %v466 = vunpack.c.l.b16 %v370
    %v467 = vunpack.c.h.b16 %v370
    %v468 = vunpack.c.l.b16 %v371
    %v469 = vunpack.c.h.b16 %v371
    %v470 = vunpack.c.l.b16 %v372
    %v471 = vunpack.c.h.b16 %v372
    %v472 = vunpack.c.l.b16 %v373
    %v473 = vunpack.c.h.b16 %v373
    %v474 = vunpack.c.l.b16 %v374
    %v475 = vunpack.c.h.b16 %v374
    %v476 = vunpack.c.l.b16 %v375
    %v477 = vunpack.c.h.b16 %v375
    %v478 = vunpack.c.l.b16 %v376
    %v479 = vunpack.c.h.b16 %v376
    %v480 = vunpack.c.l.b16 %v377
    %v481 = vunpack.c.h.b16 %v377
    %v482 = vunpack.c.l.b16 %v378
    %v483 = vunpack.c.h.b16 %v378
    %v484 = vunpack.c.l.b16 %v379
    %v485 = vunpack.c.h.b16 %v379
    %v486 = vunpack.c.l.b16 %v380
    %v487 = vunpack.c.h.b16 %v380
    %v488 = vunpack.c.l.b16 %v381
    %v489 = vunpack.c.h.b16 %v381
    %v490 = vpack.c.b16 %v428, %v426
    %v491 = vpack.c.b16 %v429, %v427
    %v492 = vpack.c.b16 %v432, %v430
    %v493 = vpack.c.b16 %v433, %v431
    %v494 = vpack.c.b16 %v436, %v434
    %v495 = vpack.c.b16 %v437, %v435
    %v496 = vpack.c.b16 %v440, %v438
    %v497 = vpack.c.b16 %v441, %v439
    %v498 = vpack.c.b16 %v444, %v442
    %v499 = vpack.c.b16 %v445, %v443
    %v500 = vpack.c.b16 %v448, %v446
    %v501 = vpack.c.b16 %v449, %v447
    %v502 = vpack.c.b16 %v452, %v450
    %v503 = vpack.c.b16 %v453, %v451
    %v504 = vpack.c.b16 %v456, %v454
    %v505 = vpack.c.b16 %v457, %v455
    %v506 = vpack.c.b16 %v460, %v458
    %v507 = vpack.c.b16 %v461, %v459
    %v508 = vpack.c.b16 %v464, %v462
    %v509 = vpack.c.b16 %v465, %v463
    %v510 = vpack.c.b16 %v468, %v466
    %v511 = vpack.c.b16 %v469, %v467
    %v512 = vpack.c.b16 %v472, %v470
    %v513 = vpack.c.b16 %v473, %v471
    %v514 = vpack.c.b16 %v476, %v474
    %v515 = vpack.c.b16 %v477, %v475
    %v516 = vpack.c.b16 %v480, %v478
    %v517 = vpack.c.b16 %v481, %v479
    %v518 = vpack.c.b16 %v484, %v482
    %v519 = vpack.c.b16 %v485, %v483
    %v520 = vpack.c.b16 %v488, %v486
    %v521 = vpack.c.b16 %v489, %v487
    %554 = vmatprep.subr.bf16.mxu0 %v491
    %555 = vmatpush1.bf16.msra.mxu0 %v490
    %556 = vmatprep.subr.bf16.mxu0 %v493
    %557 = vmatpush1.bf16.msra.mxu0 %v492
    %558 = vmatprep.subr.bf16.mxu0 %v495
    %559 = vmatpush1.bf16.msra.mxu0 %v494
    %560 = vmatprep.subr.bf16.mxu0 %v497
    %561 = vmatpush1.bf16.msra.mxu0 %v496
    %562 = vmatprep.subr.bf16.mxu0 %v499
    %563 = vmatpush1.bf16.msra.mxu0 %v498
    %564 = vmatprep.subr.bf16.mxu0 %v501
    %565 = vmatpush1.bf16.msra.mxu0 %v500
    %566 = vmatprep.subr.bf16.mxu0 %v503
    %567 = vmatpush1.bf16.msra.mxu0 %v502
    %568 = vmatprep.subr.bf16.mxu0 %v505
    %569 = vmatpush1.bf16.msra.mxu0 %v504
    %570 = vmatprep.subr.bf16.mxu0 %v507
    %571 = vmatpush1.bf16.msra.mxu0 %v506
    %572 = vmatprep.subr.bf16.mxu0 %v509
    %573 = vmatpush1.bf16.msra.mxu0 %v508
    %574 = vmatprep.subr.bf16.mxu0 %v511
    %575 = vmatpush1.bf16.msra.mxu0 %v510
    %576 = vmatprep.subr.bf16.mxu0 %v513
    %577 = vmatpush1.bf16.msra.mxu0 %v512
    %578 = vmatprep.subr.bf16.mxu0 %v515
    %579 = vmatpush1.bf16.msra.mxu0 %v514
    %580 = vmatprep.subr.bf16.mxu0 %v517
    %581 = vmatpush1.bf16.msra.mxu0 %v516
    %582 = vmatprep.subr.bf16.mxu0 %v519
    %583 = vmatpush1.bf16.msra.mxu0 %v518
    %584 = vmatprep.subr.bf16.mxu0 %v521
    %585 = vmatpush1.bf16.msra.mxu0 %v520
    %586 = vmatprep.mubr.bf16.mxu0 %v349
    %587 = vmatmul.mubr.bf16.gmra.mrb[0].mxu0 %v348
    %v588 = vpop.f32.mrb[0].mxu0
    %v589 = vadd.f32 %v387, %v588
    %v590 = vpop.f32.mrb[0].mxu0
    %v591 = vadd.f32 %v391, %v590
    %v592 = vpop.f32.mrb[0].mxu0
    %v593 = vpop.f32.mrb[0].mxu0
    %594 = vdwg.mxu0
    %v595 = vmax.f32 %v589, 0.0
    %v596 = vmax.f32 %v591, 0.0
    %v597 = vpack.c.bf16 %v595, %v595
    %v598 = vpack.c.bf16 %v596, %v596
    %v599 = vld [vmem:[#allocation13] sm:$0xff]
    %v600 = vld [vmem:[#allocation13 + $0x8] sm:$0xf]
    %v601 = vld [vmem:[#allocation13 + $0xc] sm:$0xff]
    %v602 = vld [vmem:[#allocation13 + $0x14] sm:$0xf]
    %v603 = vld [vmem:[#allocation13 + $0x18] sm:$0xff]
    %v604 = vld [vmem:[#allocation13 + $0x20] sm:$0xf]
    %v605 = vld [vmem:[#allocation13 + $0x24] sm:$0xff]
    %v606 = vld [vmem:[#allocation13 + $0x2c] sm:$0xf]
    %v607 = vld [vmem:[#allocation13 + $0x30] sm:$0xff]
    %v608 = vld [vmem:[#allocation13 + $0x38] sm:$0xf]
    %v609 = vld [vmem:[#allocation13 + $0x3c] sm:$0xff]
    %v610 = vld [vmem:[#allocation13 + $0x44] sm:$0xf]
    %v611 = vld [vmem:[#allocation13 + $0x48] sm:$0xff]
    %v612 = vld [vmem:[#allocation13 + $0x50] sm:$0xf]
    %v613 = vld [vmem:[#allocation13 + $0x54] sm:$0xff]
    %v614 = vld [vmem:[#allocation13 + $0x5c] sm:$0xf]
    %v615 = vld [vmem:[#allocation13 + $0x60] sm:$0xff]
    %v616 = vld [vmem:[#allocation13 + $0x68] sm:$0xf]
    %v617 = vld [vmem:[#allocation13 + $0x6c] sm:$0xff]
    %v618 = vld [vmem:[#allocation13 + $0x74] sm:$0xf]
    %v619 = vld [vmem:[#allocation13 + $0x78] sm:$0xff]
    %v620 = vld [vmem:[#allocation13 + $0x80] sm:$0xf]
    %v621 = vld [vmem:[#allocation13 + $0x84] sm:$0xff]
    %v622 = vld [vmem:[#allocation13 + $0x8c] sm:$0xf]
    %v623 = vld [vmem:[#allocation13 + $0x90] sm:$0xff]
    %v624 = vld [vmem:[#allocation13 + $0x98] sm:$0xf]
    %v625 = vld [vmem:[#allocation13 + $0x9c] sm:$0xff]
    %v626 = vld [vmem:[#allocation13 + $0xa4] sm:$0xf]
    %v627 = vld [vmem:[#allocation13 + $0xa8] sm:$0xff]
    %v628 = vld [vmem:[#allocation13 + $0xb0] sm:$0xf]
    %v629 = vld [vmem:[#allocation13 + $0xb4] sm:$0xff]
    %v630 = vld [vmem:[#allocation13 + $0xbc] sm:$0xf]
    %v631 = vld [vmem:[#allocation13 + $0xc0] sm:$0xff]
    %v632 = vld [vmem:[#allocation13 + $0xc8] sm:$0xf]
    %v633 = vld [vmem:[#allocation13 + $0xcc] sm:$0xff]
    %v634 = vld [vmem:[#allocation13 + $0xd4] sm:$0xf]
    %v635 = vld [vmem:[#allocation13 + $0xd8] sm:$0xff]
    %v636 = vld [vmem:[#allocation13 + $0xe0] sm:$0xf]
    %v637 = vld [vmem:[#allocation13 + $0xe4] sm:$0xff]
    %v638 = vld [vmem:[#allocation13 + $0xec] sm:$0xf]
    %v639 = vld [vmem:[#allocation13 + $0xf0] sm:$0xff]
    %v640 = vld [vmem:[#allocation13 + $0xf8] sm:$0xf]
    %v641 = vld [vmem:[#allocation13 + $0xfc] sm:$0xff]
    %v642 = vld [vmem:[#allocation13 + $0x104] sm:$0xf]
    %v643 = vld [vmem:[#allocation13 + $0x108] sm:$0xff]
    %v644 = vld [vmem:[#allocation13 + $0x110] sm:$0xf]
    %v645 = vld [vmem:[#allocation13 + $0x114] sm:$0xff]
    %v646 = vld [vmem:[#allocation13 + $0x11c] sm:$0xf]
    %v647 = vld [vmem:[#allocation13 + $0x120] sm:$0xff]
    %v648 = vld [vmem:[#allocation13 + $0x128] sm:$0xf]
    %v649 = vld [vmem:[#allocation13 + $0x12c] sm:$0xff]
    %v650 = vld [vmem:[#allocation13 + $0x134] sm:$0xf]
    %v651 = vld [vmem:[#allocation13 + $0x138] sm:$0xff]
    %v652 = vld [vmem:[#allocation13 + $0x140] sm:$0xf]
    %v653 = vld [vmem:[#allocation13 + $0x144] sm:$0xff]
    %v654 = vld [vmem:[#allocation13 + $0x14c] sm:$0xf]
    %v655 = vld [vmem:[#allocation13 + $0x150] sm:$0xff]
    %v656 = vld [vmem:[#allocation13 + $0x158] sm:$0xf]
    %v657 = vld [vmem:[#allocation13 + $0x15c] sm:$0xff]
    %v658 = vld [vmem:[#allocation13 + $0x164] sm:$0xf]
    %v659 = vld [vmem:[#allocation13 + $0x168] sm:$0xff]
    %v660 = vld [vmem:[#allocation13 + $0x170] sm:$0xf]
    %v661 = vld [vmem:[#allocation13 + $0x174] sm:$0xff]
    %v662 = vld [vmem:[#allocation13 + $0x17c] sm:$0xf]
    %v663 = vld [vmem:[#allocation14] sm:$0x7]
    %v665 = vlaneseq
    %v666 = vshrl.u32 %v665, 7
    %v667 = vsub.s32 0, %v666
    %v668 = vrot.slane %v663, %v667
    %v669 = vlaneseq
    %v670 = vshrl.u32 %v669, 7
    %v671 = vsub.s32 1, %v670
    %v672 = vrot.slane %v663, %v671
    %v673 = vlaneseq
    %v674 = vshrl.u32 %v673, 7
    %v675 = vsub.s32 2, %v674
    %v676 = vrot.slane %v663, %v675
    %v744 = vunpack.c.l.b16 %v599
    %v745 = vunpack.c.h.b16 %v599
    %v746 = vunpack.c.l.b16 %v600
    %v747 = vunpack.c.l.b16 %v601
    %v748 = vunpack.c.h.b16 %v601
    %v749 = vunpack.c.l.b16 %v602
    %v750 = vunpack.c.l.b16 %v603
    %v751 = vunpack.c.h.b16 %v603
    %v752 = vunpack.c.l.b16 %v604
    %v753 = vunpack.c.l.b16 %v605
    %v754 = vunpack.c.h.b16 %v605
    %v755 = vunpack.c.l.b16 %v606
    %v756 = vunpack.c.l.b16 %v607
    %v757 = vunpack.c.h.b16 %v607
    %v758 = vunpack.c.l.b16 %v608
    %v759 = vunpack.c.l.b16 %v609
    %v760 = vunpack.c.h.b16 %v609
    %v761 = vunpack.c.l.b16 %v610
    %v762 = vunpack.c.l.b16 %v611
    %v763 = vunpack.c.h.b16 %v611
    %v764 = vunpack.c.l.b16 %v612
    %v765 = vunpack.c.l.b16 %v613
    %v766 = vunpack.c.h.b16 %v613
    %v767 = vunpack.c.l.b16 %v614
    %v768 = vunpack.c.l.b16 %v615
    %v769 = vunpack.c.h.b16 %v615
    %v770 = vunpack.c.l.b16 %v616
    %v771 = vunpack.c.l.b16 %v617
    %v772 = vunpack.c.h.b16 %v617
    %v773 = vunpack.c.l.b16 %v618
    %v774 = vunpack.c.l.b16 %v619
    %v775 = vunpack.c.h.b16 %v619
    %v776 = vunpack.c.l.b16 %v620
    %v777 = vunpack.c.l.b16 %v621
    %v778 = vunpack.c.h.b16 %v621
    %v779 = vunpack.c.l.b16 %v622
    %v780 = vunpack.c.l.b16 %v623
    %v781 = vunpack.c.h.b16 %v623
    %v782 = vunpack.c.l.b16 %v624
    %v783 = vunpack.c.l.b16 %v625
    %v784 = vunpack.c.h.b16 %v625
    %v785 = vunpack.c.l.b16 %v626
    %v786 = vunpack.c.l.b16 %v627
    %v787 = vunpack.c.h.b16 %v627
    %v788 = vunpack.c.l.b16 %v628
    %v789 = vunpack.c.l.b16 %v629
    %v790 = vunpack.c.h.b16 %v629
    %v791 = vunpack.c.l.b16 %v630
    %v792 = vunpack.c.l.b16 %v631
    %v793 = vunpack.c.h.b16 %v631
    %v794 = vunpack.c.l.b16 %v632
    %v795 = vunpack.c.l.b16 %v633
    %v796 = vunpack.c.h.b16 %v633
    %v797 = vunpack.c.l.b16 %v634
    %v798 = vunpack.c.l.b16 %v635
    %v799 = vunpack.c.h.b16 %v635
    %v800 = vunpack.c.l.b16 %v636
    %v801 = vunpack.c.l.b16 %v637
    %v802 = vunpack.c.h.b16 %v637
    %v803 = vunpack.c.l.b16 %v638
    %v804 = vunpack.c.l.b16 %v639
    %v805 = vunpack.c.h.b16 %v639
    %v806 = vunpack.c.l.b16 %v640
    %v807 = vunpack.c.l.b16 %v641
    %v808 = vunpack.c.h.b16 %v641
    %v809 = vunpack.c.l.b16 %v642
    %v810 = vunpack.c.l.b16 %v643
    %v811 = vunpack.c.h.b16 %v643
    %v812 = vunpack.c.l.b16 %v644
    %v813 = vunpack.c.l.b16 %v645
    %v814 = vunpack.c.h.b16 %v645
    %v815 = vunpack.c.l.b16 %v646
    %v816 = vunpack.c.l.b16 %v647
    %v817 = vunpack.c.h.b16 %v647
    %v818 = vunpack.c.l.b16 %v648
    %v819 = vunpack.c.l.b16 %v649
    %v820 = vunpack.c.h.b16 %v649
    %v821 = vunpack.c.l.b16 %v650
    %v822 = vunpack.c.l.b16 %v651
    %v823 = vunpack.c.h.b16 %v651
    %v824 = vunpack.c.l.b16 %v652
    %v825 = vunpack.c.l.b16 %v653
    %v826 = vunpack.c.h.b16 %v653
    %v827 = vunpack.c.l.b16 %v654
    %v828 = vunpack.c.l.b16 %v655
    %v829 = vunpack.c.h.b16 %v655
    %v830 = vunpack.c.l.b16 %v656
    %v831 = vunpack.c.l.b16 %v657
    %v832 = vunpack.c.h.b16 %v657
    %v833 = vunpack.c.l.b16 %v658
    %v834 = vunpack.c.l.b16 %v659
    %v835 = vunpack.c.h.b16 %v659
    %v836 = vunpack.c.l.b16 %v660
    %v837 = vunpack.c.l.b16 %v661
    %v838 = vunpack.c.h.b16 %v661
    %v839 = vunpack.c.l.b16 %v662
    %v840 = vpack.c.b16 %v747, %v744
    %v841 = vpack.c.b16 %v748, %v745
    %v842 = vpack.c.b16 %v749, %v746
    %v843 = vpack.c.b16 %v753, %v750
    %v844 = vpack.c.b16 %v754, %v751
    %v845 = vpack.c.b16 %v755, %v752
    %v846 = vpack.c.b16 %v759, %v756
    %v847 = vpack.c.b16 %v760, %v757
    %v848 = vpack.c.b16 %v761, %v758
    %v849 = vpack.c.b16 %v765, %v762
    %v850 = vpack.c.b16 %v766, %v763
    %v851 = vpack.c.b16 %v767, %v764
    %v852 = vpack.c.b16 %v771, %v768
    %v853 = vpack.c.b16 %v772, %v769
    %v854 = vpack.c.b16 %v773, %v770
    %v855 = vpack.c.b16 %v777, %v774
    %v856 = vpack.c.b16 %v778, %v775
    %v857 = vpack.c.b16 %v779, %v776
    %v858 = vpack.c.b16 %v783, %v780
    %v859 = vpack.c.b16 %v784, %v781
    %v860 = vpack.c.b16 %v785, %v782
    %v861 = vpack.c.b16 %v789, %v786
    %v862 = vpack.c.b16 %v790, %v787
    %v863 = vpack.c.b16 %v791, %v788
    %v864 = vpack.c.b16 %v795, %v792
    %v865 = vpack.c.b16 %v796, %v793
    %v866 = vpack.c.b16 %v797, %v794
    %v867 = vpack.c.b16 %v801, %v798
    %v868 = vpack.c.b16 %v802, %v799
    %v869 = vpack.c.b16 %v803, %v800
    %v870 = vpack.c.b16 %v807, %v804
    %v871 = vpack.c.b16 %v808, %v805
    %v872 = vpack.c.b16 %v809, %v806
    %v873 = vpack.c.b16 %v813, %v810
    %v874 = vpack.c.b16 %v814, %v811
    %v875 = vpack.c.b16 %v815, %v812
    %v876 = vpack.c.b16 %v819, %v816
    %v877 = vpack.c.b16 %v820, %v817
    %v878 = vpack.c.b16 %v821, %v818
    %v879 = vpack.c.b16 %v825, %v822
    %v880 = vpack.c.b16 %v826, %v823
    %v881 = vpack.c.b16 %v827, %v824
    %v882 = vpack.c.b16 %v831, %v828
    %v883 = vpack.c.b16 %v832, %v829
    %v884 = vpack.c.b16 %v833, %v830
    %v885 = vpack.c.b16 %v837, %v834
    %v886 = vpack.c.b16 %v838, %v835
    %v887 = vpack.c.b16 %v839, %v836
    %936 = vmatprep.subr.bf16.mxu0 %v841
    %937 = vmatpush1.bf16.msra.mxu0 %v840
    %938 = vmatprep.subr.bf16.mxu0 %v844
    %939 = vmatpush1.bf16.msra.mxu0 %v843
    %940 = vmatprep.subr.bf16.mxu0 %v847
    %941 = vmatpush1.bf16.msra.mxu0 %v846
    %942 = vmatprep.subr.bf16.mxu0 %v850
    %943 = vmatpush1.bf16.msra.mxu0 %v849
    %944 = vmatprep.subr.bf16.mxu0 %v853
    %945 = vmatpush1.bf16.msra.mxu0 %v852
    %946 = vmatprep.subr.bf16.mxu0 %v856
    %947 = vmatpush1.bf16.msra.mxu0 %v855
    %948 = vmatprep.subr.bf16.mxu0 %v859
    %949 = vmatpush1.bf16.msra.mxu0 %v858
    %950 = vmatprep.subr.bf16.mxu0 %v862
    %951 = vmatpush1.bf16.msra.mxu0 %v861
    %952 = vmatprep.subr.bf16.mxu0 %v865
    %953 = vmatpush1.bf16.msra.mxu0 %v864
    %954 = vmatprep.subr.bf16.mxu0 %v868
    %955 = vmatpush1.bf16.msra.mxu0 %v867
    %956 = vmatprep.subr.bf16.mxu0 %v871
    %957 = vmatpush1.bf16.msra.mxu0 %v870
    %958 = vmatprep.subr.bf16.mxu0 %v874
    %959 = vmatpush1.bf16.msra.mxu0 %v873
    %960 = vmatprep.subr.bf16.mxu0 %v877
    %961 = vmatpush1.bf16.msra.mxu0 %v876
    %962 = vmatprep.subr.bf16.mxu0 %v880
    %963 = vmatpush1.bf16.msra.mxu0 %v879
    %964 = vmatprep.subr.bf16.mxu0 %v883
    %965 = vmatpush1.bf16.msra.mxu0 %v882
    %966 = vmatprep.subr.bf16.mxu0 %v886
    %967 = vmatpush1.bf16.msra.mxu0 %v885
    %968 = vmatprep.mubr.bf16.mxu0 %v598
    %969 = vmatmul.mubr.bf16.gmra.mrb[0].mxu0 %v597
    %v970 = vpop.f32.mrb[0].mxu0
    %v971 = vadd.f32 %v668, %v970
    %v972 = vpop.f32.mrb[0].mxu0
    %v973 = vadd.f32 %v672, %v972
    %v974 = vpop.f32.mrb[0].mxu0
    %v975 = vpop.f32.mrb[0].mxu0
    %976 = vdwg.mxu0
    %977 = vmatprep.subr.bf16.mxu0 0
    %978 = vmatpush1.bf16.msra.mxu0 %v842
    %979 = vmatprep.subr.bf16.mxu0 0
    %980 = vmatpush1.bf16.msra.mxu0 %v845
    %981 = vmatprep.subr.bf16.mxu0 0
    %982 = vmatpush1.bf16.msra.mxu0 %v848
    %983 = vmatprep.subr.bf16.mxu0 0
    %984 = vmatpush1.bf16.msra.mxu0 %v851
    %985 = vmatprep.subr.bf16.mxu0 0
    %986 = vmatpush1.bf16.msra.mxu0 %v854
    %987 = vmatprep.subr.bf16.mxu0 0
    %988 = vmatpush1.bf16.msra.mxu0 %v857
    %989 = vmatprep.subr.bf16.mxu0 0
    %990 = vmatpush1.bf16.msra.mxu0 %v860
    %991 = vmatprep.subr.bf16.mxu0 0
    %992 = vmatpush1.bf16.msra.mxu0 %v863
    %993 = vmatprep.subr.bf16.mxu0 0
    %994 = vmatpush1.bf16.msra.mxu0 %v866
    %995 = vmatprep.subr.bf16.mxu0 0
    %996 = vmatpush1.bf16.msra.mxu0 %v869
    %997 = vmatprep.subr.bf16.mxu0 0
    %998 = vmatpush1.bf16.msra.mxu0 %v872
    %999 = vmatprep.subr.bf16.mxu0 0
    %1000 = vmatpush1.bf16.msra.mxu0 %v875
    %1001 = vmatprep.subr.bf16.mxu0 0
    %1002 = vmatpush1.bf16.msra.mxu0 %v878
    %1003 = vmatprep.subr.bf16.mxu0 0
    %1004 = vmatpush1.bf16.msra.mxu0 %v881
    %1005 = vmatprep.subr.bf16.mxu0 0
    %1006 = vmatpush1.bf16.msra.mxu0 %v884
    %1007 = vmatprep.subr.bf16.mxu0 0
    %1008 = vmatpush1.bf16.msra.mxu0 %v887
    %1009 = vmatprep.mubr.bf16.mxu0 %v598
    %1010 = vmatmul.mubr.bf16.gmra.mrb[0].mxu0 %v597
    %v1011 = vpop.f32.mrb[0].mxu0
    %v1012 = vadd.f32 %v676, %v1011
    %v1013 = vpop.f32.mrb[0].mxu0
    %v1014 = vpop.f32.mrb[0].mxu0
    %v1015 = vpop.f32.mrb[0].mxu0
    %1016 = vdwg.mxu0
    %vm1017 = vcmask 203776
    %v1018 = vsel %vm1017, %v971, -inf
    %1019 = vmax.xlane.f32.xlu0 %v1018
    %v1020 = vpop.xlane.xlu0 %1019
    %v1021 = vsub.f32 %v971, %v1020
    %v1022 = vmul.f32 %v1021, 1.442695
    %v1023 = vpow.pop %v1022
    %v1024 = vsel %vm1017, %v1023, 0.0
    %1025 = vadd.xlane.f32.xlu0 %v1024
    %v1026 = vpop.xlane.xlu0 %1025
    %v1027 = vrcp.pop %v1026
    %v1028 = vmul.f32 %v1023, %v1027
    %v1029 = vld [vmem:[%s9] sm:$0xff]
    %v1030 = vld [vmem:[%s9 + $0x8] sm:$0xff]
    %v1031 = vld [vmem:[%s9 + $0x10] sm:$0xff]
    %v1032 = vld [vmem:[%s9 + $0x18] sm:$0x1]
    %v1034 = vsel %vm1017, %v1028, 0
    %vm1036 = vcmask 1040384
    %v1038 = vsel %vm1036, %v1032, 0
    %1040 = vmatprep.subr.mxu0 0.0
    %1041 = vmatpush1.msra.mxu0 %v1029
    %1042 = vmatprep.subr.mxu0 0.0
    %1043 = vmatpush1.msra.mxu0 %v1030
    %1044 = vmatprep.subr.mxu0 0.0
    %1045 = vmatpush1.msra.mxu0 %v1031
    %1046 = vmatprep.subr.mxu0 0.0
    %1047 = vmatpush1.msra.mxu0 %v1038
    %1048 = vmatprep.subr.mxu0 0.0
    %1049 = vmatpush1.msra.mxu0 0.0
    %1050 = vmatprep.subr.mxu0 0.0
    %1051 = vmatpush1.msra.mxu0 0.0
    %1052 = vmatprep.subr.mxu0 0.0
    %1053 = vmatpush1.msra.mxu0 0.0
    %1054 = vmatprep.subr.mxu0 0.0
    %1055 = vmatpush1.msra.mxu0 0.0
    %1056 = vmatprep.subr.mxu0 0.0
    %1057 = vmatpush1.msra.mxu0 0.0
    %1058 = vmatprep.subr.mxu0 0.0
    %1059 = vmatpush1.msra.mxu0 0.0
    %1060 = vmatprep.subr.mxu0 0.0
    %1061 = vmatpush1.msra.mxu0 0.0
    %1062 = vmatprep.subr.mxu0 0.0
    %1063 = vmatpush1.msra.mxu0 0.0
    %1064 = vmatprep.subr.mxu0 0.0
    %1065 = vmatpush1.msra.mxu0 0.0
    %1066 = vmatprep.subr.mxu0 0.0
    %1067 = vmatpush1.msra.mxu0 0.0
    %1068 = vmatprep.subr.mxu0 0.0
    %1069 = vmatpush1.msra.mxu0 0.0
    %1070 = vmatprep.subr.mxu0 0.0
    %1071 = vmatpush1.msra.mxu0 0.0
    %1072 = vmatprep.subr.mxu0 0.0
    %1073 = vmatpush1.msra.mxu0 0.0
    %1074 = vmatprep.subr.mxu0 0.0
    %1075 = vmatpush1.msra.mxu0 0.0
    %1076 = vmatprep.subr.mxu0 0.0
    %1077 = vmatpush1.msra.mxu0 0.0
    %1078 = vmatprep.subr.mxu0 0.0
    %1079 = vmatpush1.msra.mxu0 0.0
    %1080 = vmatprep.subr.mxu0 0.0
    %1081 = vmatpush1.msra.mxu0 0.0
    %1082 = vmatprep.subr.mxu0 0.0
    %1083 = vmatpush1.msra.mxu0 0.0
    %1084 = vmatprep.subr.mxu0 0.0
    %1085 = vmatpush1.msra.mxu0 0.0
    %1086 = vmatprep.subr.mxu0 0.0
    %1087 = vmatpush1.msra.mxu0 0.0
    %1088 = vmatprep.subr.mxu0 0.0
    %1089 = vmatpush1.msra.mxu0 0.0
    %1090 = vmatprep.subr.mxu0 0.0
    %1091 = vmatpush1.msra.mxu0 0.0
    %1092 = vmatprep.subr.mxu0 0.0
    %1093 = vmatpush1.msra.mxu0 0.0
    %1094 = vmatprep.subr.mxu0 0.0
    %1095 = vmatpush1.msra.mxu0 0.0
    %1096 = vmatprep.subr.mxu0 0.0
    %1097 = vmatpush1.msra.mxu0 0.0
    %1098 = vmatprep.subr.mxu0 0.0
    %1099 = vmatpush1.msra.mxu0 0.0
    %1100 = vmatprep.subr.mxu0 0.0
    %1101 = vmatpush1.msra.mxu0 0.0
    %1102 = vmatprep.subr.mxu0 0.0
    %1103 = vmatpush1.msra.mxu0 0.0
    %1104 = vmatprep.mubr.f32.mxu0 0.0
    %1105 = vmatmul.mubr.f32.gmra.mrb[0].mxu0 %v1034
    %v1106 = vpop.f32.mrb[0].mxu0
    %v1107 = vadd.f32 0.0, %v1106
    %v1108 = vpop.f32.mrb[0].mxu0
    %1109 = vdwg.mxu0
    %1110 = vset.pattern.permute.xlu0 4
    %1111 = vperm.xlu0 %1110, %v155
    %v1112 = vpop.permute.xlu0 %1111
    %vm1114 = vcmp.lt.f32.partialorder %v1107, %v1112
    %v1115 = vsel %vm1114, 1, 0
    %v1116 = vsel %vm1017, %v1115, 0
    %v1117 = vand.u32 %v1116, 65535
    %v1118 = vshrl.u32 %v1116, 16
    %v1119 = vcvt.s32.f32 %v1117
    %v1120 = vcvt.s32.f32 %v1118
    %1121 = vadd.xlane.f32.xlu0 %v1119
    %v1122 = vpop.xlane.xlu0 %1121
    %1123 = vadd.xlane.f32.xlu0 %v1120
    %v1124 = vpop.xlane.xlu0 %1123
    %v1125 = vcvt.f32.s32 %v1122
    %v1126 = vcvt.f32.s32 %v1124
    %v1127 = vshll.u32 %v1126, 16
    %v1128 = vadd.s32 %v1127, %v1125
    %vm1129 = vcmp.lt.s32.totalorder %v1128, 24
    %v1130 = vsel %vm1129, %v1128, 24
    %v1131 = vld [vmem:[%s11] sm:$0x3]
    %v1132 = vlaneseq
    %v1133 = vshrl.u32 %v1132, 7
    %v1134 = vsub.s32 0, %v1133
    %v1135 = vrot.slane %v1131, %v1134
    %v1136 = vlaneseq
    %v1137 = vshrl.u32 %v1136, 7
    %v1138 = vsub.s32 1, %v1137
    %v1139 = vrot.slane %v1131, %v1138
    %vm1140 = vcmp.eq.s32.totalorder %v1135, %v1130
    %vm1141 = vcmp.eq.s32.totalorder %v1139, %v1130
    %v1142 = vsel %vm1140, 1, 0
    %v1143 = vsel %vm1141, 1, 0
    %v1144 = vcvt.s32.f32 %v1142
    %v1145 = vcvt.s32.f32 %v1143
    %v1146 = vmul.f32 %v973, %v1144
    %v1147 = vmul.f32 %v1012, %v1145
    %v1148 = vld [vmem:[#allocation16] sm:$0xff]
    %v1149 = vld [vmem:[#allocation16 + $0x8] sm:$0xff]
    %v1150 = vld [vmem:[#allocation16 + $0x10] sm:$0xff]
    %v1151 = vld [vmem:[#allocation16 + $0x18] sm:$0xff]
    %v1152 = vld [vmem:[#allocation16 + $0x20] sm:$0xff]
    %v1153 = vld [vmem:[#allocation16 + $0x28] sm:$0xff]
    %v1154 = vld [vmem:[#allocation16 + $0x30] sm:$0xff]
    %v1155 = vld [vmem:[#allocation16 + $0x38] sm:$0xff]
    %v1156 = vld [vmem:[#allocation16 + $0x40] sm:$0xff]
    %v1157 = vld [vmem:[#allocation16 + $0x48] sm:$0xff]
    %v1158 = vld [vmem:[#allocation16 + $0x50] sm:$0xff]
    %v1159 = vld [vmem:[#allocation16 + $0x58] sm:$0xff]
    %v1160 = vld [vmem:[#allocation16 + $0x60] sm:$0xff]
    %v1161 = vld [vmem:[#allocation16 + $0x68] sm:$0xff]
    %v1162 = vld [vmem:[#allocation16 + $0x70] sm:$0xff]
    %v1163 = vld [vmem:[#allocation16 + $0x78] sm:$0xff]
    %v1164 = vld [vmem:[#allocation16 + $0x80] sm:$0xff]
    %v1165 = vld [vmem:[#allocation16 + $0x88] sm:$0xff]
    %v1166 = vld [vmem:[#allocation16 + $0x90] sm:$0xff]
    %v1167 = vld [vmem:[#allocation16 + $0x98] sm:$0xff]
    %v1168 = vld [vmem:[#allocation16 + $0xa0] sm:$0xff]
    %v1169 = vld [vmem:[#allocation16 + $0xa8] sm:$0xff]
    %v1170 = vld [vmem:[#allocation16 + $0xb0] sm:$0xff]
    %v1171 = vld [vmem:[#allocation16 + $0xb8] sm:$0xff]
    %v1172 = vld [vmem:[#allocation16 + $0xc0] sm:$0xff]
    %v1173 = vld [vmem:[#allocation16 + $0xc8] sm:$0xff]
    %v1174 = vld [vmem:[#allocation16 + $0xd0] sm:$0xff]
    %v1175 = vld [vmem:[#allocation16 + $0xd8] sm:$0xff]
    %v1176 = vld [vmem:[#allocation16 + $0xe0] sm:$0xff]
    %v1177 = vld [vmem:[#allocation16 + $0xe8] sm:$0xff]
    %v1178 = vld [vmem:[#allocation16 + $0xf0] sm:$0xff]
    %v1179 = vld [vmem:[#allocation16 + $0xf8] sm:$0xff]
    %v1180 = vld [vmem:[#allocation16 + $0x100] sm:$0xff]
    %v1181 = vld [vmem:[#allocation16 + $0x108] sm:$0xff]
    %v1182 = vld [vmem:[#allocation16 + $0x110] sm:$0xff]
    %v1183 = vld [vmem:[#allocation16 + $0x118] sm:$0xff]
    %v1184 = vld [vmem:[#allocation16 + $0x120] sm:$0xff]
    %v1185 = vld [vmem:[#allocation16 + $0x128] sm:$0xff]
    %v1186 = vld [vmem:[#allocation16 + $0x130] sm:$0xff]
    %v1187 = vld [vmem:[#allocation16 + $0x138] sm:$0xff]
    %v1188 = vld [vmem:[#allocation16 + $0x140] sm:$0xff]
    %v1189 = vld [vmem:[#allocation16 + $0x148] sm:$0xff]
    %v1190 = vld [vmem:[#allocation16 + $0x150] sm:$0xff]
    %v1191 = vld [vmem:[#allocation16 + $0x158] sm:$0xff]
    %v1192 = vld [vmem:[#allocation16 + $0x160] sm:$0xff]
    %v1193 = vld [vmem:[#allocation16 + $0x168] sm:$0xff]
    %v1194 = vld [vmem:[#allocation16 + $0x170] sm:$0xff]
    %v1195 = vld [vmem:[#allocation16 + $0x178] sm:$0xff]
    %v1196 = vld [vmem:[#allocation16 + $0x180] sm:$0xff]
    %v1197 = vld [vmem:[#allocation16 + $0x188] sm:$0xff]
    %v1198 = vld [vmem:[#allocation16 + $0x190] sm:$0xff]
    %v1199 = vld [vmem:[#allocation16 + $0x198] sm:$0xff]
    %v1200 = vld [vmem:[#allocation16 + $0x1a0] sm:$0xff]
    %v1201 = vld [vmem:[#allocation16 + $0x1a8] sm:$0xff]
    %v1202 = vld [vmem:[#allocation16 + $0x1b0] sm:$0xff]
    %v1203 = vld [vmem:[#allocation16 + $0x1b8] sm:$0xff]
    %v1204 = vld [vmem:[#allocation16 + $0x1c0] sm:$0xff]
    %v1205 = vld [vmem:[#allocation16 + $0x1c8] sm:$0xff]
    %v1206 = vld [vmem:[#allocation16 + $0x1d0] sm:$0xff]
    %v1207 = vld [vmem:[#allocation16 + $0x1d8] sm:$0xff]
    %v1208 = vld [vmem:[#allocation16 + $0x1e0] sm:$0xff]
    %v1209 = vld [vmem:[#allocation16 + $0x1e8] sm:$0xff]
    %v1210 = vld [vmem:[#allocation16 + $0x1f0] sm:$0xff]
    %v1211 = vld [vmem:[#allocation16 + $0x1f8] sm:$0xff]
    %1212 = vmatprep.subr.mxu0 %v1149
    %1213 = vmatpush1.msra.mxu0 %v1148
    %1214 = vmatprep.subr.mxu0 %v1151
    %1215 = vmatpush1.msra.mxu0 %v1150
    %1216 = vmatprep.subr.mxu0 %v1153
    %1217 = vmatpush1.msra.mxu0 %v1152
    %1218 = vmatprep.subr.mxu0 %v1155
    %1219 = vmatpush1.msra.mxu0 %v1154
    %1220 = vmatprep.subr.mxu0 %v1157
    %1221 = vmatpush1.msra.mxu0 %v1156
    %1222 = vmatprep.subr.mxu0 %v1159
    %1223 = vmatpush1.msra.mxu0 %v1158
    %1224 = vmatprep.subr.mxu0 %v1161
    %1225 = vmatpush1.msra.mxu0 %v1160
    %1226 = vmatprep.subr.mxu0 %v1163
    %1227 = vmatpush1.msra.mxu0 %v1162
    %1228 = vmatprep.subr.mxu0 %v1165
    %1229 = vmatpush1.msra.mxu0 %v1164
    %1230 = vmatprep.subr.mxu0 %v1167
    %1231 = vmatpush1.msra.mxu0 %v1166
    %1232 = vmatprep.subr.mxu0 %v1169
    %1233 = vmatpush1.msra.mxu0 %v1168
    %1234 = vmatprep.subr.mxu0 %v1171
    %1235 = vmatpush1.msra.mxu0 %v1170
    %1236 = vmatprep.subr.mxu0 %v1173
    %1237 = vmatpush1.msra.mxu0 %v1172
    %1238 = vmatprep.subr.mxu0 %v1175
    %1239 = vmatpush1.msra.mxu0 %v1174
    %1240 = vmatprep.subr.mxu0 %v1177
    %1241 = vmatpush1.msra.mxu0 %v1176
    %1242 = vmatprep.subr.mxu0 %v1179
    %1243 = vmatpush1.msra.mxu0 %v1178
    %1244 = vmatprep.subr.mxu0 %v1181
    %1245 = vmatpush1.msra.mxu0 %v1180
    %1246 = vmatprep.subr.mxu0 %v1183
    %1247 = vmatpush1.msra.mxu0 %v1182
    %1248 = vmatprep.subr.mxu0 %v1185
    %1249 = vmatpush1.msra.mxu0 %v1184
    %1250 = vmatprep.subr.mxu0 %v1187
    %1251 = vmatpush1.msra.mxu0 %v1186
    %1252 = vmatprep.subr.mxu0 %v1189
    %1253 = vmatpush1.msra.mxu0 %v1188
    %1254 = vmatprep.subr.mxu0 %v1191
    %1255 = vmatpush1.msra.mxu0 %v1190
    %1256 = vmatprep.subr.mxu0 %v1193
    %1257 = vmatpush1.msra.mxu0 %v1192
    %1258 = vmatprep.subr.mxu0 %v1195
    %1259 = vmatpush1.msra.mxu0 %v1194
    %1260 = vmatprep.subr.mxu0 %v1197
    %1261 = vmatpush1.msra.mxu0 %v1196
    %1262 = vmatprep.subr.mxu0 %v1199
    %1263 = vmatpush1.msra.mxu0 %v1198
    %1264 = vmatprep.subr.mxu0 %v1201
    %1265 = vmatpush1.msra.mxu0 %v1200
    %1266 = vmatprep.subr.mxu0 %v1203
    %1267 = vmatpush1.msra.mxu0 %v1202
    %1268 = vmatprep.subr.mxu0 %v1205
    %1269 = vmatpush1.msra.mxu0 %v1204
    %1270 = vmatprep.subr.mxu0 %v1207
    %1271 = vmatpush1.msra.mxu0 %v1206
    %1272 = vmatprep.subr.mxu0 %v1209
    %1273 = vmatpush1.msra.mxu0 %v1208
    %1274 = vmatprep.subr.mxu0 %v1211
    %1275 = vmatpush1.msra.mxu0 %v1210
    %1276 = vmatprep.mubr.f32.mxu0 %v1147
    %1277 = vmatmul.mubr.f32.gmra.mrb[0].mxu0 %v1146
    %v1278 = vpop.f32.mrb[0].mxu0
    %v1279 = vadd.f32 0.0, %v1278
    %v1280 = vpop.f32.mrb[0].mxu0
    %v1281 = vadd.f32 0.0, %v1280
    %1282 = vdwg.mxu0
    %v1283 = vmul.f32 %v1281, 1.442695
    %v1284 = vpow.pop %v1283
    %v1285 = vmul.f32 %v155, %v1284
    %v1286 = vadd.f32 %v1279, %v1285
    %1287 = vst [vmem:[#allocation17] sm:$0xff] %v1286
    // Predicated region
    $region86: #{tpu_custom_call.1} parent=1 // pred_check
      _
    $region87: #{tpu_custom_call.1} parent=1 // pred_check_branch
      %1289 = sbr.rel (0) target = $region89
    $region88: #{tpu_custom_call.1} parent=1 // pred_region
      %s1291 = ssub.s32 128, 128
      %1292 = vsyncadd [#allocation4], %s1291
      %s1294 = sshll.u32 [#allocation17], 4
      %s1295 = int_to_ptr.vmem [resolvable:$true] %s1294
      %1297 = dma.vmem_to_hbm [thread:$0]  %s1295, 128, %s12, [#allocation4]
    $region89: #{tpu_custom_call.1} parent=1 // pred_fallthru
      _
    // Predicated region
    $region90: #{tpu_custom_call.1} parent=1 // pred_check
      _
    $region91: #{tpu_custom_call.1} parent=1 // pred_check_branch
      %1299 = sbr.rel (0) target = $region93
    $region92: #{tpu_custom_call.1} parent=1 // pred_region
      %1300 = dma.done [#allocation4], 128
    $region93: #{tpu_custom_call.1} parent=1 // pred_fallthru
      _
    %1301 = vsyncpa [#allocation3], 1
    %1302 = vsyncpa [#allocation6], 1
    %1303 = vsyncpa [#allocation9], 1
    %1304 = vsyncpa [#allocation12], 1
    %1305 = vsyncpa [#allocation15], 1
    %1306 = vsyncpa [#allocation4], 1

</llo_original>
